<compile_context>
chip_gen: v7x
topology: tpu7x:2x2x1
jax: 0.10.0
libtpu: 0.0.40
codegen_flags: <defaults>
</compile_context>

<pallas_src>
import functools

import jax
import jax.numpy as jnp
from jax.experimental import pallas as pl
from jax.experimental.pallas import tpu as pltpu


MM_DTYPE = jnp.bfloat16   # full-rate MXU dtype on v5e / v6e / v7x -- keep bf16 everywhere
N_CLS = 10
MAX_TM = 512              # max batch-tile rows


def _round_up(x, m):
    return (x + m - 1) // m * m


def _pick_tm(batch):
    """Batch tile: <= MAX_TM rows, multiple of 16 (dense bf16 sublane packing),
    and at least two grid steps for batch > 16 so both v7x TensorCores get work."""
    if batch <= 16:
        return _round_up(max(batch, 1), 16)
    half = -(-batch // 2)
    return min(MAX_TM, _round_up(half, 16))


# ----------------------------------------------------------------------------
# Fused Pallas kernel: 4 hidden layers + fused classification/validity head
# ----------------------------------------------------------------------------
def _discriminator_kernel(xd_ref, xt_ref,
                          w1d_ref, w1t_ref, b1_ref,
                          w2_ref, b2_ref, w3_ref, b3_ref, w4_ref, b4_ref,
                          wh_ref, bh_ref,
                          out_ref, *, n_cls):
    def lrelu(v):                      # slope 0.2 < 1  =>  max(v, 0.2v) == LeakyReLU
        return jnp.maximum(v, 0.2 * v)

    # Cast the f32 input tile to bf16 on the VPU (inputs are read from HBM as f32
    # exactly once; no padded bf16 copy is ever materialized in HBM).
    xd = xd_ref[...].astype(MM_DTYPE)          # (tm, 2352) image features
    xt = xt_ref[...].astype(MM_DTYPE)          # (tm, 128)  condition/color tail (zero padded)

    # Layer 1: split-K matmul (image part + tail part), f32 accumulation.
    h = jnp.dot(xd, w1d_ref[...], preferred_element_type=jnp.float32)
    h = h + jnp.dot(xt, w1t_ref[...], preferred_element_type=jnp.float32)
    h = lrelu(h + b1_ref[...]).astype(MM_DTYPE)

    def layer(v, w_ref, b_ref):
        acc = jnp.dot(v, w_ref[...], preferred_element_type=jnp.float32)
        return lrelu(acc + b_ref[...]).astype(MM_DTYPE)

    # Padded lanes carry exact zeros -> LeakyReLU keeps them zero and the
    # zero-padded weight rows of the next layer ignore them.
    h = layer(h, w2_ref, b2_ref)
    h = layer(h, w3_ref, b3_ref)
    h = layer(h, w4_ref, b4_ref)

    # Fused head: lanes 0..n_cls-1 = class logits, lane n_cls = validity logit,
    # remaining lanes are exact zeros (zero weight columns + zero bias).
    logits = jnp.dot(h, wh_ref[...], preferred_element_type=jnp.float32) + bh_ref[...]
    col = jax.lax.broadcasted_iota(jnp.int32, logits.shape, 1)
    cls_mask = col < n_cls

    # Masked, numerically stable softmax over the n_cls real lanes.
    masked = jnp.where(cls_mask, logits, jnp.float32(-1e30))
    m = jnp.max(masked, axis=-1, keepdims=True)
    e = jnp.where(cls_mask, jnp.exp(masked - m), 0.0)
    probs = e * pl.reciprocal(jnp.sum(e, axis=-1, keepdims=True), approx=True)

    # Validity: LeakyReLU then sigmoid (computed on all lanes, only lane n_cls kept).
    v = lrelu(logits)
    sig = pl.reciprocal(1.0 + jnp.exp(-v), approx=True)

    out = jnp.where(cls_mask, probs, jnp.where(col == n_cls, sig, 0.0))
    out_ref[...] = out.astype(out_ref.dtype)


# ----------------------------------------------------------------------------
# Parameters: raw (PyTorch-convention, f32) + packed (padded/transposed, bf16)
# ----------------------------------------------------------------------------
def init_params(key, out_layer=32):
    """PyTorch nn.Linear default init: U(-1/sqrt(fan_in), 1/sqrt(fan_in))."""
    def linear_init(k, fan_in, fan_out):
        kw, kb = jax.random.split(k)
        bound = 1.0 / jnp.sqrt(jnp.float32(fan_in))
        w = jax.random.uniform(kw, (fan_out, fan_in), jnp.float32, -bound, bound)
        b = jax.random.uniform(kb, (fan_out,), jnp.float32, -bound, bound)
        return w, b

    d_in = 3 * 784 + 2 + 2
    dims = [(d_in, out_layer * 8), (out_layer * 8, out_layer * 4),
            (out_layer * 4, out_layer * 2), (out_layer * 2, out_layer),
            (out_layer, 10), (out_layer, 1)]
    names = ["l1", "l2", "l3", "l4", "cls", "valid"]
    raw = {}
    for name, k, (fi, fo) in zip(names, jax.random.split(key, len(dims)), dims):
        w, b = linear_init(k, fi, fo)
        raw[name + "_w"] = w
        raw[name + "_b"] = b
    return raw


def pack_params(raw):
    """One-time pre-transpose + zero padding of every weight to 128-aligned lanes.

    layer1 is split into an image part (K=2352, kept un-padded: full-dim BlockSpec)
    and a 128-padded tail for the 4 condition/color features.  The cls and valid
    heads are fused into a single (K4_pad, 128) weight: columns 0..9 = cls,
    column 10 = valid.
    """
    def pad_wb(w, b):                  # w: (fan_out, fan_in) PyTorch layout
        fo, fi = w.shape
        kp, np_ = _round_up(fi, 128), _round_up(fo, 128)
        wp = jnp.zeros((kp, np_), jnp.float32).at[:fi, :fo].set(w.T).astype(MM_DTYPE)
        bp = jnp.zeros((1, np_), jnp.float32).at[0, :fo].set(b)
        return wp, bp

    packed = {}

    # layer1: split K = image (2352) + condition/color tail (4 -> padded to 128)
    w1, b1 = raw["l1_w"], raw["l1_b"]                 # (N1, 2356), (N1,)
    n1, k1 = w1.shape
    k_img = k1 - 4
    n1p = _round_up(n1, 128)
    w1d = jnp.zeros((k_img, n1p), jnp.float32).at[:, :n1].set(w1[:, :k_img].T)
    packed["l1d_w"] = w1d.astype(MM_DTYPE)
    w1t = jnp.zeros((128, n1p), jnp.float32).at[:4, :n1].set(w1[:, k_img:].T)
    packed["l1t_w"] = w1t.astype(MM_DTYPE)
    packed["l1_b"] = jnp.zeros((1, n1p), jnp.float32).at[0, :n1].set(b1)

    for name in ("l2", "l3", "l4"):
        wp, bp = pad_wb(raw[name + "_w"], raw[name + "_b"])
        packed[name + "_w"] = wp
        packed[name + "_b"] = bp

    # fused classification + validity head (lanes 0..9 = cls, lane 10 = valid)
    k4 = raw["cls_w"].shape[1]
    k4p = _round_up(k4, 128)
    wh = jnp.zeros((k4p, 128), jnp.float32)
    wh = wh.at[:k4, :N_CLS].set(raw["cls_w"].T)
    wh = wh.at[:k4, N_CLS].set(raw["valid_w"][0])
    packed["head_w"] = wh.astype(MM_DTYPE)
    bh = jnp.zeros((1, 128), jnp.float32)
    bh = bh.at[0, :N_CLS].set(raw["cls_b"]).at[0, N_CLS].set(raw["valid_b"][0])
    packed["head_b"] = bh
    return packed


# ----------------------------------------------------------------------------
# Forward wrapper (jit-fused: concat/pad/slice fuse around the pallas_call)
# ----------------------------------------------------------------------------
@jax.jit
def discriminator_forward(packed, data, condition, color):
    B = data.shape[0]
    x_img = data.reshape(B, -1).astype(jnp.float32)               # (B, 2352), free reshape
    tail = jnp.concatenate([condition.astype(jnp.float32),
                            color.astype(jnp.float32)], axis=1)   # (B, 4), tiny

    Kd, N1 = packed["l1d_w"].shape
    Kt = packed["l1t_w"].shape[0]
    N2 = packed["l2_w"].shape[1]
    N3 = packed["l3_w"].shape[1]
    N4 = packed["l4_w"].shape[1]
    Nh = packed["head_w"].shape[1]
    assert x_img.shape[1] == Kd, (x_img.shape, Kd)

    tm = _pick_tm(B)
    Mp = _round_up(B, tm)
    if Mp > B:                        # only copies when B is not a multiple of tm
        x_img = jnp.pad(x_img, ((0, Mp - B), (0, 0)))
    tail_p = jnp.zeros((Mp, Kt), jnp.float32).at[:B, :tail.shape[1]].set(tail)

    grid = (Mp // tm,)
    row = lambda i: (i, 0)
    const = lambda i: (0, 0)          # weights/biases: fetched once, stay VMEM-resident

    kernel = functools.partial(_discriminator_kernel, n_cls=N_CLS)
    out = pl.pallas_call(
        kernel,
        out_shape=jax.ShapeDtypeStruct((Mp, Nh), jnp.float32),
        grid=grid,
        in_specs=[
            pl.BlockSpec((tm, Kd), row),        # image features, f32, full-K block
            pl.BlockSpec((tm, Kt), row),        # condition/color tail (padded to 128)
            pl.BlockSpec((Kd, N1), const), pl.BlockSpec((Kt, N1), const),
            pl.BlockSpec((1, N1), const),
            pl.BlockSpec((N1, N2), const), pl.BlockSpec((1, N2), const),
            pl.BlockSpec((N2, N3), const), pl.BlockSpec((1, N3), const),
            pl.BlockSpec((N3, N4), const), pl.BlockSpec((1, N4), const),
            pl.BlockSpec((N4, Nh), const), pl.BlockSpec((1, Nh), const),
        ],
        out_specs=pl.BlockSpec((tm, Nh), row),
        compiler_params=pltpu.CompilerParams(
            dimension_semantics=("parallel",),
            vmem_limit_bytes=32 * 1024 * 1024),
    )(x_img, tail_p,
      packed["l1d_w"], packed["l1t_w"], packed["l1_b"],
      packed["l2_w"], packed["l2_b"],
      packed["l3_w"], packed["l3_b"],
      packed["l4_w"], packed["l4_b"],
      packed["head_w"], packed["head_b"])

    validity = out[:B, N_CLS:N_CLS + 1]
    cls = out[:B, :N_CLS]
    return validity, cls


# ----------------------------------------------------------------------------
# Pure-JAX f32 reference (exact PyTorch math) for a sanity check.
# (Kernel uses bf16 weights/activations on the MXU; the loose 2e-2 tolerance
#  below accounts for that -- acceptable for a GAN discriminator.)
# ----------------------------------------------------------------------------
def reference_forward(raw, data, condition, color):
    B = data.shape[0]
    x = jnp.concatenate(
        [data.reshape(B, -1).astype(jnp.float32),
         condition.astype(jnp.float32),
         color.astype(jnp.float32)], axis=1)
    lrelu = lambda v: jnp.where(v >= 0.0, v, 0.2 * v)
    x = lrelu(x @ raw["l1_w"].T + raw["l1_b"])
    x = lrelu(x @ raw["l2_w"].T + raw["l2_b"])
    x = lrelu(x @ raw["l3_w"].T + raw["l3_b"])
    x = lrelu(x @ raw["l4_w"].T + raw["l4_b"])
    cls = jax.nn.softmax(x @ raw["cls_w"].T + raw["cls_b"], axis=-1)
    validity = jax.nn.sigmoid(lrelu(x @ raw["valid_w"].T + raw["valid_b"]))
    return validity, cls


if __name__ == "__main__":
    key = jax.random.PRNGKey(0)
    pkey, dkey, ckey, colkey = jax.random.split(key, 4)

    out_layer = 32
    raw = init_params(pkey, out_layer)
    packed = pack_params(raw)

    B = 4
    data = jax.random.normal(dkey, (B, 3, 28, 28), jnp.float32)       # image
    condition = jax.random.randint(ckey, (B, 2), 0, 2, jnp.int32)     # .float()-ed in forward
    color = jax.random.uniform(colkey, (B, 2), jnp.float32)

    validity, cls = discriminator_forward(packed, data, condition, color)
    validity = jax.block_until_ready(validity)
    cls = jax.block_until_ready(cls)
    assert validity.shape == (B, 1), validity.shape
    assert cls.shape == (B, N_CLS), cls.shape

    ref_v, ref_c = reference_forward(raw, data, condition, color)
    assert jnp.allclose(validity, ref_v, rtol=2e-2, atol=1e-2), "validity mismatch"
    assert jnp.allclose(cls, ref_c, rtol=2e-2, atol=1e-2), "cls mismatch"
    assert jnp.allclose(jnp.sum(cls, axis=-1), 1.0, atol=2e-3), "softmax not normalized"
    print("KERNEL_OK")
</pallas_src>

<mosaic_0001>
module attributes {stable_mosaic.version = 11 : i64} {
  func.func @_discriminator_kernel(%arg0: i32, %arg1: memref<16x2352xf32, #tpu.memory_space<vmem>>, %arg2: memref<16x128xf32, #tpu.memory_space<vmem>>, %arg3: memref<2352x256xbf16, #tpu.memory_space<vmem>>, %arg4: memref<128x256xbf16, #tpu.memory_space<vmem>>, %arg5: memref<1x256xf32, #tpu.memory_space<vmem>>, %arg6: memref<256x128xbf16, #tpu.memory_space<vmem>>, %arg7: memref<1x128xf32, #tpu.memory_space<vmem>>, %arg8: memref<128x128xbf16, #tpu.memory_space<vmem>>, %arg9: memref<1x128xf32, #tpu.memory_space<vmem>>, %arg10: memref<128x128xbf16, #tpu.memory_space<vmem>>, %arg11: memref<1x128xf32, #tpu.memory_space<vmem>>, %arg12: memref<128x128xbf16, #tpu.memory_space<vmem>>, %arg13: memref<1x128xf32, #tpu.memory_space<vmem>>, %arg14: memref<16x128xf32, #tpu.memory_space<vmem>>) attributes {dimension_semantics = [#tpu.dimension_semantics<parallel>], iteration_bounds = array<i64: 1>, scalar_prefetch = 0 : i64, scratch_operands = 0 : i64, tpu.core_type = #tpu.core_type<tc>, window_params = [{transform_indices = @transform_0, window_bounds = array<i64: 16, 2352>}, {transform_indices = @transform_1, window_bounds = array<i64: 16, 128>}, {pipeline_mode = #tpu.pipeline_mode<synchronous>, transform_indices = @transform_2, window_bounds = array<i64: 2352, 256>}, {pipeline_mode = #tpu.pipeline_mode<synchronous>, transform_indices = @transform_3, window_bounds = array<i64: 128, 256>}, {pipeline_mode = #tpu.pipeline_mode<synchronous>, transform_indices = @transform_4, window_bounds = array<i64: 1, 256>}, {pipeline_mode = #tpu.pipeline_mode<synchronous>, transform_indices = @transform_5, window_bounds = array<i64: 256, 128>}, {pipeline_mode = #tpu.pipeline_mode<synchronous>, transform_indices = @transform_6, window_bounds = array<i64: 1, 128>}, {pipeline_mode = #tpu.pipeline_mode<synchronous>, transform_indices = @transform_7, window_bounds = array<i64: 128, 128>}, {pipeline_mode = #tpu.pipeline_mode<synchronous>, transform_indices = @transform_8, window_bounds = array<i64: 1, 128>}, {pipeline_mode = #tpu.pipeline_mode<synchronous>, transform_indices = @transform_9, window_bounds = array<i64: 128, 128>}, {pipeline_mode = #tpu.pipeline_mode<synchronous>, transform_indices = @transform_10, window_bounds = array<i64: 1, 128>}, {pipeline_mode = #tpu.pipeline_mode<synchronous>, transform_indices = @transform_11, window_bounds = array<i64: 128, 128>}, {pipeline_mode = #tpu.pipeline_mode<synchronous>, transform_indices = @transform_12, window_bounds = array<i64: 1, 128>}, {transform_indices = @transform_13, window_bounds = array<i64: 16, 128>}]} {
    %c0 = arith.constant 0 : index
    %c0_0 = arith.constant 0 : index
    %0 = vector.load %arg1[%c0, %c0_0] : memref<16x2352xf32, #tpu.memory_space<vmem>>, vector<16x2352xf32>
    %1 = arith.truncf %0 : vector<16x2352xf32> to vector<16x2352xbf16>
    %c0_1 = arith.constant 0 : index
    %c0_2 = arith.constant 0 : index
    %2 = vector.load %arg2[%c0_1, %c0_2] : memref<16x128xf32, #tpu.memory_space<vmem>>, vector<16x128xf32>
    %3 = arith.truncf %2 : vector<16x128xf32> to vector<16x128xbf16>
    %c0_3 = arith.constant 0 : index
    %c0_4 = arith.constant 0 : index
    %4 = vector.load %arg3[%c0_3, %c0_4] : memref<2352x256xbf16, #tpu.memory_space<vmem>>, vector<2352x256xbf16>
    %cst = arith.constant dense<0.000000e+00> : vector<16x256xf32>
    %5 = tpu.matmul %1, %4, %cst {dimension_numbers = #tpu.dot_dimension_numbers<[1], [0], [0], [1], [0, 0, 1, 1], [], []>} : vector<16x2352xbf16>, vector<2352x256xbf16>, vector<16x256xf32> -> vector<16x256xf32>
    %c0_5 = arith.constant 0 : index
    %c0_6 = arith.constant 0 : index
    %6 = vector.load %arg4[%c0_5, %c0_6] : memref<128x256xbf16, #tpu.memory_space<vmem>>, vector<128x256xbf16>
    %cst_7 = arith.constant dense<0.000000e+00> : vector<16x256xf32>
    %7 = tpu.matmul %3, %6, %cst_7 {dimension_numbers = #tpu.dot_dimension_numbers<[1], [0], [0], [1], [0, 0, 1, 1], [], []>} : vector<16x128xbf16>, vector<128x256xbf16>, vector<16x256xf32> -> vector<16x256xf32>
    %8 = arith.addf %5, %7 : vector<16x256xf32>
    %c0_8 = arith.constant 0 : index
    %c0_9 = arith.constant 0 : index
    %9 = vector.load %arg5[%c0_8, %c0_9] : memref<1x256xf32, #tpu.memory_space<vmem>>, vector<1x256xf32>
    %10 = vector.broadcast %9 : vector<1x256xf32> to vector<16x256xf32>
    %11 = arith.addf %8, %10 : vector<16x256xf32>
    %cst_10 = arith.constant 2.000000e-01 : f32
    %12 = vector.broadcast %cst_10 : f32 to vector<16x256xf32>
    %13 = arith.mulf %12, %11 : vector<16x256xf32>
    %14 = arith.maximumf %11, %13 : vector<16x256xf32>
    %15 = arith.truncf %14 : vector<16x256xf32> to vector<16x256xbf16>
    %c0_11 = arith.constant 0 : index
    %c0_12 = arith.constant 0 : index
    %16 = vector.load %arg6[%c0_11, %c0_12] : memref<256x128xbf16, #tpu.memory_space<vmem>>, vector<256x128xbf16>
    %cst_13 = arith.constant dense<0.000000e+00> : vector<16x128xf32>
    %17 = tpu.matmul %15, %16, %cst_13 {dimension_numbers = #tpu.dot_dimension_numbers<[1], [0], [0], [1], [0, 0, 1, 1], [], []>} : vector<16x256xbf16>, vector<256x128xbf16>, vector<16x128xf32> -> vector<16x128xf32>
    %c0_14 = arith.constant 0 : index
    %c0_15 = arith.constant 0 : index
    %18 = vector.load %arg7[%c0_14, %c0_15] : memref<1x128xf32, #tpu.memory_space<vmem>>, vector<1x128xf32>
    %19 = vector.broadcast %18 : vector<1x128xf32> to vector<16x128xf32>
    %20 = arith.addf %17, %19 : vector<16x128xf32>
    %cst_16 = arith.constant 2.000000e-01 : f32
    %21 = vector.broadcast %cst_16 : f32 to vector<16x128xf32>
    %22 = arith.mulf %21, %20 : vector<16x128xf32>
    %23 = arith.maximumf %20, %22 : vector<16x128xf32>
    %24 = arith.truncf %23 : vector<16x128xf32> to vector<16x128xbf16>
    %c0_17 = arith.constant 0 : index
    %c0_18 = arith.constant 0 : index
    %25 = vector.load %arg8[%c0_17, %c0_18] : memref<128x128xbf16, #tpu.memory_space<vmem>>, vector<128x128xbf16>
    %cst_19 = arith.constant dense<0.000000e+00> : vector<16x128xf32>
    %26 = tpu.matmul %24, %25, %cst_19 {dimension_numbers = #tpu.dot_dimension_numbers<[1], [0], [0], [1], [0, 0, 1, 1], [], []>} : vector<16x128xbf16>, vector<128x128xbf16>, vector<16x128xf32> -> vector<16x128xf32>
    %c0_20 = arith.constant 0 : index
    %c0_21 = arith.constant 0 : index
    %27 = vector.load %arg9[%c0_20, %c0_21] : memref<1x128xf32, #tpu.memory_space<vmem>>, vector<1x128xf32>
    %28 = vector.broadcast %27 : vector<1x128xf32> to vector<16x128xf32>
    %29 = arith.addf %26, %28 : vector<16x128xf32>
    %cst_22 = arith.constant 2.000000e-01 : f32
    %30 = vector.broadcast %cst_22 : f32 to vector<16x128xf32>
    %31 = arith.mulf %30, %29 : vector<16x128xf32>
    %32 = arith.maximumf %29, %31 : vector<16x128xf32>
    %33 = arith.truncf %32 : vector<16x128xf32> to vector<16x128xbf16>
    %c0_23 = arith.constant 0 : index
    %c0_24 = arith.constant 0 : index
    %34 = vector.load %arg10[%c0_23, %c0_24] : memref<128x128xbf16, #tpu.memory_space<vmem>>, vector<128x128xbf16>
    %cst_25 = arith.constant dense<0.000000e+00> : vector<16x128xf32>
    %35 = tpu.matmul %33, %34, %cst_25 {dimension_numbers = #tpu.dot_dimension_numbers<[1], [0], [0], [1], [0, 0, 1, 1], [], []>} : vector<16x128xbf16>, vector<128x128xbf16>, vector<16x128xf32> -> vector<16x128xf32>
    %c0_26 = arith.constant 0 : index
    %c0_27 = arith.constant 0 : index
    %36 = vector.load %arg11[%c0_26, %c0_27] : memref<1x128xf32, #tpu.memory_space<vmem>>, vector<1x128xf32>
    %37 = vector.broadcast %36 : vector<1x128xf32> to vector<16x128xf32>
    %38 = arith.addf %35, %37 : vector<16x128xf32>
    %cst_28 = arith.constant 2.000000e-01 : f32
    %39 = vector.broadcast %cst_28 : f32 to vector<16x128xf32>
    %40 = arith.mulf %39, %38 : vector<16x128xf32>
    %41 = arith.maximumf %38, %40 : vector<16x128xf32>
    %42 = arith.truncf %41 : vector<16x128xf32> to vector<16x128xbf16>
    %c0_29 = arith.constant 0 : index
    %c0_30 = arith.constant 0 : index
    %43 = vector.load %arg12[%c0_29, %c0_30] : memref<128x128xbf16, #tpu.memory_space<vmem>>, vector<128x128xbf16>
    %cst_31 = arith.constant dense<0.000000e+00> : vector<16x128xf32>
    %44 = tpu.matmul %42, %43, %cst_31 {dimension_numbers = #tpu.dot_dimension_numbers<[1], [0], [0], [1], [0, 0, 1, 1], [], []>} : vector<16x128xbf16>, vector<128x128xbf16>, vector<16x128xf32> -> vector<16x128xf32>
    %c0_32 = arith.constant 0 : index
    %c0_33 = arith.constant 0 : index
    %45 = vector.load %arg13[%c0_32, %c0_33] : memref<1x128xf32, #tpu.memory_space<vmem>>, vector<1x128xf32>
    %46 = vector.broadcast %45 : vector<1x128xf32> to vector<16x128xf32>
    %47 = arith.addf %44, %46 : vector<16x128xf32>
    %48 = tpu.iota {dimensions = array<i32: 1>} : vector<16x128xi32>
    %c10_i32 = arith.constant 10 : i32
    %49 = vector.broadcast %c10_i32 : i32 to vector<16x128xi32>
    %50 = arith.cmpi slt, %48, %49 : vector<16x128xi32>
    %cst_34 = arith.constant -1.000000e+30 : f32
    %51 = vector.broadcast %cst_34 : f32 to vector<16x128xf32>
    %52 = arith.select %50, %47, %51 : vector<16x128xi1>, vector<16x128xf32>
    %cst_35 = arith.constant dense<0xFF800000> : vector<16xf32>
    %53 = vector.multi_reduction <maximumf>, %52, %cst_35 [1] : vector<16x128xf32> to vector<16xf32>
    %54 = vector.shape_cast %53 : vector<16xf32> to vector<16x1xf32>
    %55 = vector.broadcast %54 : vector<16x1xf32> to vector<16x128xf32>
    %56 = arith.subf %52, %55 : vector<16x128xf32>
    %57 = math.exp %56 : vector<16x128xf32>
    %cst_36 = arith.constant 0.000000e+00 : f32
    %58 = vector.broadcast %cst_36 : f32 to vector<16x128xf32>
    %59 = arith.select %50, %57, %58 : vector<16x128xi1>, vector<16x128xf32>
    %cst_37 = arith.constant dense<0.000000e+00> : vector<16xf32>
    %60 = vector.multi_reduction <add>, %59, %cst_37 [1] : vector<16x128xf32> to vector<16xf32>
    %61 = vector.shape_cast %60 : vector<16xf32> to vector<16x1xf32>
    %62 = tpu.reciprocal %61 {approx = true} : vector<16x1xf32> -> vector<16x1xf32>
    %63 = vector.broadcast %62 : vector<16x1xf32> to vector<16x128xf32>
    %64 = arith.mulf %59, %63 : vector<16x128xf32>
    %cst_38 = arith.constant 2.000000e-01 : f32
    %65 = vector.broadcast %cst_38 : f32 to vector<16x128xf32>
    %66 = arith.mulf %65, %47 : vector<16x128xf32>
    %67 = arith.maximumf %47, %66 : vector<16x128xf32>
    %cst_39 = arith.constant 0.000000e+00 : f32
    %68 = vector.broadcast %cst_39 : f32 to vector<16x128xf32>
    %69 = arith.subf %68, %67 : vector<16x128xf32>
    %70 = math.exp %69 : vector<16x128xf32>
    %cst_40 = arith.constant 1.000000e+00 : f32
    %71 = vector.broadcast %cst_40 : f32 to vector<16x128xf32>
    %72 = arith.addf %71, %70 : vector<16x128xf32>
    %73 = tpu.reciprocal %72 {approx = true} : vector<16x128xf32> -> vector<16x128xf32>
    %c10_i32_41 = arith.constant 10 : i32
    %74 = vector.broadcast %c10_i32_41 : i32 to vector<16x128xi32>
    %75 = arith.cmpi eq, %48, %74 : vector<16x128xi32>
    %cst_42 = arith.constant 0.000000e+00 : f32
    %76 = vector.broadcast %cst_42 : f32 to vector<16x128xf32>
    %77 = arith.select %75, %73, %76 : vector<16x128xi1>, vector<16x128xf32>
    %78 = arith.select %50, %64, %77 : vector<16x128xi1>, vector<16x128xf32>
    %c0_43 = arith.constant 0 : index
    %c0_44 = arith.constant 0 : index
    %79 = vector.load %arg14[%c0_43, %c0_44] : memref<16x128xf32, #tpu.memory_space<vmem>>, vector<16x128xf32>
    tpu.vector_store %arg14[%c0_43, %c0_44], %78 {strides = array<i32>} : memref<16x128xf32, #tpu.memory_space<vmem>>, vector<16x128xf32>,
    return
  }
  func.func @transform_0(%arg0: i32) -> (i32, i32) {
    %c0_i32 = arith.constant 0 : i32
    %c0_i32_0 = arith.constant 0 : i32
    return %arg0, %c0_i32 : i32, i32
  }
  func.func @transform_1(%arg0: i32) -> (i32, i32) {
    %c0_i32 = arith.constant 0 : i32
    %c0_i32_0 = arith.constant 0 : i32
    return %arg0, %c0_i32 : i32, i32
  }
  func.func @transform_2(%arg0: i32) -> (i32, i32) {
    %c0_i32 = arith.constant 0 : i32
    %c0_i32_0 = arith.constant 0 : i32
    %c0_i32_1 = arith.constant 0 : i32
    return %c0_i32, %c0_i32_0 : i32, i32
  }
  func.func @transform_3(%arg0: i32) -> (i32, i32) {
    %c0_i32 = arith.constant 0 : i32
    %c0_i32_0 = arith.constant 0 : i32
    %c0_i32_1 = arith.constant 0 : i32
    return %c0_i32, %c0_i32_0 : i32, i32
  }
  func.func @transform_4(%arg0: i32) -> (i32, i32) {
    %c0_i32 = arith.constant 0 : i32
    %c0_i32_0 = arith.constant 0 : i32
    %c0_i32_1 = arith.constant 0 : i32
    return %c0_i32, %c0_i32_0 : i32, i32
  }
  func.func @transform_5(%arg0: i32) -> (i32, i32) {
    %c0_i32 = arith.constant 0 : i32
    %c0_i32_0 = arith.constant 0 : i32
    %c0_i32_1 = arith.constant 0 : i32
    return %c0_i32, %c0_i32_0 : i32, i32
  }
  func.func @transform_6(%arg0: i32) -> (i32, i32) {
    %c0_i32 = arith.constant 0 : i32
    %c0_i32_0 = arith.constant 0 : i32
    %c0_i32_1 = arith.constant 0 : i32
    return %c0_i32, %c0_i32_0 : i32, i32
  }
  func.func @transform_7(%arg0: i32) -> (i32, i32) {
    %c0_i32 = arith.constant 0 : i32
    %c0_i32_0 = arith.constant 0 : i32
    %c0_i32_1 = arith.constant 0 : i32
    return %c0_i32, %c0_i32_0 : i32, i32
  }
  func.func @transform_8(%arg0: i32) -> (i32, i32) {
    %c0_i32 = arith.constant 0 : i32
    %c0_i32_0 = arith.constant 0 : i32
    %c0_i32_1 = arith.constant 0 : i32
    return %c0_i32, %c0_i32_0 : i32, i32
  }
  func.func @transform_9(%arg0: i32) -> (i32, i32) {
    %c0_i32 = arith.constant 0 : i32
    %c0_i32_0 = arith.constant 0 : i32
    %c0_i32_1 = arith.constant 0 : i32
    return %c0_i32, %c0_i32_0 : i32, i32
  }
  func.func @transform_10(%arg0: i32) -> (i32, i32) {
    %c0_i32 = arith.constant 0 : i32
    %c0_i32_0 = arith.constant 0 : i32
    %c0_i32_1 = arith.constant 0 : i32
    return %c0_i32, %c0_i32_0 : i32, i32
  }
  func.func @transform_11(%arg0: i32) -> (i32, i32) {
    %c0_i32 = arith.constant 0 : i32
    %c0_i32_0 = arith.constant 0 : i32
    %c0_i32_1 = arith.constant 0 : i32
    return %c0_i32, %c0_i32_0 : i32, i32
  }
  func.func @transform_12(%arg0: i32) -> (i32, i32) {
    %c0_i32 = arith.constant 0 : i32
    %c0_i32_0 = arith.constant 0 : i32
    %c0_i32_1 = arith.constant 0 : i32
    return %c0_i32, %c0_i32_0 : i32, i32
  }
  func.func @transform_13(%arg0: i32) -> (i32, i32) {
    %c0_i32 = arith.constant 0 : i32
    %c0_i32_0 = arith.constant 0 : i32
    return %arg0, %c0_i32 : i32, i32
  }
}

</mosaic_0001>

<llo_original>
// kernel: discriminator_forward.1
$region0: #{discriminator_forward.1}
  #allocation0 [shape = 'u32[]', space=smem, size = 0x4, offset = 0x4, fixed_abs, tag = 'smem constant byte address 0x4 - core index']
  #allocation1 [shape = 'u32[144,128]{1,0:T(1,128)}', space=vmem, size = 0x12000, scoped, tag = 'internal scratch']
  %s0 = inlined_call_operand.vmem [shape: f32[16,2352], index: 0, kind: input, shape index: {}]
  %s1 = inlined_call_operand.vmem [shape: f32[16,128], index: 1, kind: input, shape index: {}]
  %s2 = inlined_call_operand.hbm [shape: bf16[2352,256], index: 2, kind: input, shape index: {}]
  %s3 = inlined_call_operand.hbm [shape: bf16[128,256], index: 3, kind: input, shape index: {}]
  %s4 = inlined_call_operand.hbm [shape: f32[1,256], index: 4, kind: input, shape index: {}]
  %s5 = inlined_call_operand.hbm [shape: bf16[256,128], index: 5, kind: input, shape index: {}]
  %s6 = inlined_call_operand.hbm [shape: f32[1,128], index: 6, kind: input, shape index: {}]
  %s7 = inlined_call_operand.hbm [shape: bf16[128,128], index: 7, kind: input, shape index: {}]
  %s8 = inlined_call_operand.hbm [shape: f32[1,128], index: 8, kind: input, shape index: {}]
  %s9 = inlined_call_operand.hbm [shape: bf16[128,128], index: 9, kind: input, shape index: {}]
  %s10 = inlined_call_operand.hbm [shape: f32[1,128], index: 10, kind: input, shape index: {}]
  %s11 = inlined_call_operand.hbm [shape: bf16[128,128], index: 11, kind: input, shape index: {}]
  %s12 = inlined_call_operand.hbm [shape: f32[1,128], index: 12, kind: input, shape index: {}]
  %s13 = inlined_call_operand.vmem [shape: f32[16,128], index: 13, kind: output, shape index: {}]
  %s14 = sld [smem:[#allocation0]]
  $region106: #{discriminator_forward.1} parent=0
    _
  %s16 = ssub.s32 1, %s14
  %s17 = scalar_select 0, %s16, %s14
  $region1: #{discriminator_forward.1} parent=0
    #allocation2 [shape = 'u8[1204224]{0}', space=vmem, size = 0x126000, scoped, tag = 'input window, operand 2, single buffered']
    #allocation3 [shape = 's32[1]{0}', space=sflag, size = 0x4, scoped, tag = 'scoped memory for discriminator_forward.1']
    #allocation4 [shape = 'u8[65536]{0}', space=vmem, size = 0x10000, scoped, tag = 'input window, operand 3, single buffered']
    #allocation5 [shape = 's32[1]{0}', space=sflag, size = 0x4, scoped, tag = 'scoped memory for discriminator_forward.1']
    #allocation6 [shape = 'u8[1024]{0}', space=vmem, size = 0x400, scoped, tag = 'input window, operand 4, single buffered']
    #allocation7 [shape = 'u8[65536]{0}', space=vmem, size = 0x10000, scoped, tag = 'input window, operand 5, single buffered']
    #allocation8 [shape = 's32[1]{0}', space=sflag, size = 0x4, scoped, tag = 'scoped memory for discriminator_forward.1']
    #allocation9 [shape = 'u8[512]{0}', space=vmem, size = 0x400, scoped, tag = 'input window, operand 6, single buffered']
    #allocation10 [shape = 'u8[32768]{0}', space=vmem, size = 0x8000, scoped, tag = 'input window, operand 7, single buffered']
    #allocation11 [shape = 's32[1]{0}', space=sflag, size = 0x4, scoped, tag = 'scoped memory for discriminator_forward.1']
    #allocation12 [shape = 'u8[512]{0}', space=vmem, size = 0x400, scoped, tag = 'input window, operand 8, single buffered']
    #allocation13 [shape = 'u8[32768]{0}', space=vmem, size = 0x8000, scoped, tag = 'input window, operand 9, single buffered']
    #allocation14 [shape = 's32[1]{0}', space=sflag, size = 0x4, scoped, tag = 'scoped memory for discriminator_forward.1']
    #allocation15 [shape = 'u8[512]{0}', space=vmem, size = 0x400, scoped, tag = 'input window, operand 10, single buffered']
    #allocation16 [shape = 'u8[32768]{0}', space=vmem, size = 0x8000, scoped, tag = 'input window, operand 11, single buffered']
    #allocation17 [shape = 's32[1]{0}', space=sflag, size = 0x4, scoped, tag = 'scoped memory for discriminator_forward.1']
    #allocation18 [shape = 'u8[512]{0}', space=vmem, size = 0x400, scoped, tag = 'input window, operand 12, single buffered']
    %18 = vsyncpa [#allocation3], 0
    %19 = vsyncpa [#allocation5], 0
    %20 = vsyncpa [#allocation8], 0
    %21 = vsyncpa [#allocation11], 0
    %22 = vsyncpa [#allocation14], 0
    %23 = vsyncpa [#allocation17], 0
    // Predicated region
    $region2: #{discriminator_forward.1} parent=1 // pred_check
      _
    $region3: #{discriminator_forward.1} parent=1 // pred_check_branch
      %25 = sbr.rel (0) target = $region5
    $region4: #{discriminator_forward.1} parent=1 // pred_region
      _
    $region5: #{discriminator_forward.1} parent=1 // pred_fallthru
      _
    // Predicated region
    $region6: #{discriminator_forward.1} parent=1 // pred_check
      _
    $region7: #{discriminator_forward.1} parent=1 // pred_check_branch
      %27 = sbr.rel (0) target = $region9
    $region8: #{discriminator_forward.1} parent=1 // pred_region
      _
    $region9: #{discriminator_forward.1} parent=1 // pred_fallthru
      _
    // Predicated region
    $region10: #{discriminator_forward.1} parent=1 // pred_check
      _
    $region11: #{discriminator_forward.1} parent=1 // pred_check_branch
      %29 = sbr.rel (0) target = $region13
    $region12: #{discriminator_forward.1} parent=1 // pred_region
      %s31 = ssub.s32 37632, 37632
      %32 = vsyncadd [#allocation3], %s31
      %s33 = sshll.u32 [#allocation2], 4
      %s34 = int_to_ptr.vmem [resolvable:$true] %s33
      %39 = dma.hbm_to_vmem [thread:$0]  %s2, 37632, %s34, [#allocation3], 128, 128, 8
    $region13: #{discriminator_forward.1} parent=1 // pred_fallthru
      _
    // Predicated region
    $region14: #{discriminator_forward.1} parent=1 // pred_check
      _
    $region15: #{discriminator_forward.1} parent=1 // pred_check_branch
      %41 = sbr.rel (0) target = $region17
    $region16: #{discriminator_forward.1} parent=1 // pred_region
      %s43 = ssub.s32 2048, 2048
      %44 = vsyncadd [#allocation5], %s43
      %s45 = sshll.u32 [#allocation4], 4
      %s46 = int_to_ptr.vmem [resolvable:$true] %s45
      %51 = dma.hbm_to_vmem [thread:$0]  %s3, 2048, %s46, [#allocation5], 128, 128, 8
    $region17: #{discriminator_forward.1} parent=1 // pred_fallthru
      _
    // Predicated region
    $region18: #{discriminator_forward.1} parent=1 // pred_check
      _
    $region19: #{discriminator_forward.1} parent=1 // pred_check_branch
      %53 = sbr.rel (0) target = $region21
    $region20: #{discriminator_forward.1} parent=1 // pred_region
      %s55 = ssub.s32 32, 32
      %56 = vsyncadd [#allocation5], %s55
      %s58 = sshll.u32 [#allocation6], 4
      %s59 = int_to_ptr.vmem [resolvable:$true] %s58
      %61 = dma.hbm_to_vmem [thread:$0]  %s4, 32, %s59, [#allocation5]
    $region21: #{discriminator_forward.1} parent=1 // pred_fallthru
      _
    // Predicated region
    $region22: #{discriminator_forward.1} parent=1 // pred_check
      _
    $region23: #{discriminator_forward.1} parent=1 // pred_check_branch
      %63 = sbr.rel (0) target = $region25
    $region24: #{discriminator_forward.1} parent=1 // pred_region
      %s65 = ssub.s32 2048, 2048
      %66 = vsyncadd [#allocation8], %s65
      %s67 = sshll.u32 [#allocation7], 4
      %s68 = int_to_ptr.vmem [resolvable:$true] %s67
      %73 = dma.hbm_to_vmem [thread:$0]  %s5, 2048, %s68, [#allocation8], 64, 64, 4
    $region25: #{discriminator_forward.1} parent=1 // pred_fallthru
      _
    // Predicated region
    $region26: #{discriminator_forward.1} parent=1 // pred_check
      _
    $region27: #{discriminator_forward.1} parent=1 // pred_check_branch
      %75 = sbr.rel (0) target = $region29
    $region28: #{discriminator_forward.1} parent=1 // pred_region
      %s77 = ssub.s32 16, 16
      %78 = vsyncadd [#allocation8], %s77
      %s80 = sshll.u32 [#allocation9], 4
      %s81 = int_to_ptr.vmem [resolvable:$true] %s80
      %83 = dma.hbm_to_vmem [thread:$0]  %s6, 16, %s81, [#allocation8]
    $region29: #{discriminator_forward.1} parent=1 // pred_fallthru
      _
    // Predicated region
    $region30: #{discriminator_forward.1} parent=1 // pred_check
      _
    $region31: #{discriminator_forward.1} parent=1 // pred_check_branch
      %85 = sbr.rel (0) target = $region33
    $region32: #{discriminator_forward.1} parent=1 // pred_region
      %s87 = ssub.s32 1024, 1024
      %88 = vsyncadd [#allocation11], %s87
      %s89 = sshll.u32 [#allocation10], 4
      %s90 = int_to_ptr.vmem [resolvable:$true] %s89
      %95 = dma.hbm_to_vmem [thread:$0]  %s7, 1024, %s90, [#allocation11], 64, 64, 4
    $region33: #{discriminator_forward.1} parent=1 // pred_fallthru
      _
    // Predicated region
    $region34: #{discriminator_forward.1} parent=1 // pred_check
      _
    $region35: #{discriminator_forward.1} parent=1 // pred_check_branch
      %97 = sbr.rel (0) target = $region37
    $region36: #{discriminator_forward.1} parent=1 // pred_region
      %s99 = ssub.s32 16, 16
      %100 = vsyncadd [#allocation11], %s99
      %s102 = sshll.u32 [#allocation12], 4
      %s103 = int_to_ptr.vmem [resolvable:$true] %s102
      %105 = dma.hbm_to_vmem [thread:$0]  %s8, 16, %s103, [#allocation11]
    $region37: #{discriminator_forward.1} parent=1 // pred_fallthru
      _
    // Predicated region
    $region38: #{discriminator_forward.1} parent=1 // pred_check
      _
    $region39: #{discriminator_forward.1} parent=1 // pred_check_branch
      %107 = sbr.rel (0) target = $region41
    $region40: #{discriminator_forward.1} parent=1 // pred_region
      %s109 = ssub.s32 1024, 1024
      %110 = vsyncadd [#allocation14], %s109
      %s111 = sshll.u32 [#allocation13], 4
      %s112 = int_to_ptr.vmem [resolvable:$true] %s111
      %117 = dma.hbm_to_vmem [thread:$0]  %s9, 1024, %s112, [#allocation14], 64, 64, 4
    $region41: #{discriminator_forward.1} parent=1 // pred_fallthru
      _
    // Predicated region
    $region42: #{discriminator_forward.1} parent=1 // pred_check
      _
    $region43: #{discriminator_forward.1} parent=1 // pred_check_branch
      %119 = sbr.rel (0) target = $region45
    $region44: #{discriminator_forward.1} parent=1 // pred_region
      %s121 = ssub.s32 16, 16
      %122 = vsyncadd [#allocation14], %s121
      %s124 = sshll.u32 [#allocation15], 4
      %s125 = int_to_ptr.vmem [resolvable:$true] %s124
      %127 = dma.hbm_to_vmem [thread:$0]  %s10, 16, %s125, [#allocation14]
    $region45: #{discriminator_forward.1} parent=1 // pred_fallthru
      _
    // Predicated region
    $region46: #{discriminator_forward.1} parent=1 // pred_check
      _
    $region47: #{discriminator_forward.1} parent=1 // pred_check_branch
      %129 = sbr.rel (0) target = $region49
    $region48: #{discriminator_forward.1} parent=1 // pred_region
      %s131 = ssub.s32 1024, 1024
      %132 = vsyncadd [#allocation17], %s131
      %s133 = sshll.u32 [#allocation16], 4
      %s134 = int_to_ptr.vmem [resolvable:$true] %s133
      %139 = dma.hbm_to_vmem [thread:$0]  %s11, 1024, %s134, [#allocation17], 64, 64, 4
    $region49: #{discriminator_forward.1} parent=1 // pred_fallthru
      _
    // Predicated region
    $region50: #{discriminator_forward.1} parent=1 // pred_check
      _
    $region51: #{discriminator_forward.1} parent=1 // pred_check_branch
      %141 = sbr.rel (0) target = $region53
    $region52: #{discriminator_forward.1} parent=1 // pred_region
      %s143 = ssub.s32 16, 16
      %144 = vsyncadd [#allocation17], %s143
      %s146 = sshll.u32 [#allocation18], 4
      %s147 = int_to_ptr.vmem [resolvable:$true] %s146
      %149 = dma.hbm_to_vmem [thread:$0]  %s12, 16, %s147, [#allocation17]
    $region53: #{discriminator_forward.1} parent=1 // pred_fallthru
      _
    // Predicated region
    $region54: #{discriminator_forward.1} parent=1 // pred_check
      _
    $region55: #{discriminator_forward.1} parent=1 // pred_check_branch
      %151 = sbr.rel (0) target = $region57
    $region56: #{discriminator_forward.1} parent=1 // pred_region
      %152 = dma.done [#allocation3], 37632
    $region57: #{discriminator_forward.1} parent=1 // pred_fallthru
      _
    // Predicated region
    $region58: #{discriminator_forward.1} parent=1 // pred_check
      _
    $region59: #{discriminator_forward.1} parent=1 // pred_check_branch
      %154 = sbr.rel (0) target = $region61
    $region60: #{discriminator_forward.1} parent=1 // pred_region
      %155 = dma.done [#allocation5], 2048
    $region61: #{discriminator_forward.1} parent=1 // pred_fallthru
      _
    // Predicated region
    $region62: #{discriminator_forward.1} parent=1 // pred_check
      _
    $region63: #{discriminator_forward.1} parent=1 // pred_check_branch
      %157 = sbr.rel (0) target = $region65
    $region64: #{discriminator_forward.1} parent=1 // pred_region
      %158 = dma.done [#allocation5], 32
    $region65: #{discriminator_forward.1} parent=1 // pred_fallthru
      _
    // Predicated region
    $region66: #{discriminator_forward.1} parent=1 // pred_check
      _
    $region67: #{discriminator_forward.1} parent=1 // pred_check_branch
      %160 = sbr.rel (0) target = $region69
    $region68: #{discriminator_forward.1} parent=1 // pred_region
      %161 = dma.done [#allocation8], 2048
    $region69: #{discriminator_forward.1} parent=1 // pred_fallthru
      _
    // Predicated region
    $region70: #{discriminator_forward.1} parent=1 // pred_check
      _
    $region71: #{discriminator_forward.1} parent=1 // pred_check_branch
      %163 = sbr.rel (0) target = $region73
    $region72: #{discriminator_forward.1} parent=1 // pred_region
      %164 = dma.done [#allocation8], 16
    $region73: #{discriminator_forward.1} parent=1 // pred_fallthru
      _
    // Predicated region
    $region74: #{discriminator_forward.1} parent=1 // pred_check
      _
    $region75: #{discriminator_forward.1} parent=1 // pred_check_branch
      %166 = sbr.rel (0) target = $region77
    $region76: #{discriminator_forward.1} parent=1 // pred_region
      %167 = dma.done [#allocation11], 1024
    $region77: #{discriminator_forward.1} parent=1 // pred_fallthru
      _
    // Predicated region
    $region78: #{discriminator_forward.1} parent=1 // pred_check
      _
    $region79: #{discriminator_forward.1} parent=1 // pred_check_branch
      %169 = sbr.rel (0) target = $region81
    $region80: #{discriminator_forward.1} parent=1 // pred_region
      %170 = dma.done [#allocation11], 16
    $region81: #{discriminator_forward.1} parent=1 // pred_fallthru
      _
    // Predicated region
    $region82: #{discriminator_forward.1} parent=1 // pred_check
      _
    $region83: #{discriminator_forward.1} parent=1 // pred_check_branch
      %172 = sbr.rel (0) target = $region85
    $region84: #{discriminator_forward.1} parent=1 // pred_region
      %173 = dma.done [#allocation14], 1024
    $region85: #{discriminator_forward.1} parent=1 // pred_fallthru
      _
    // Predicated region
    $region86: #{discriminator_forward.1} parent=1 // pred_check
      _
    $region87: #{discriminator_forward.1} parent=1 // pred_check_branch
      %175 = sbr.rel (0) target = $region89
    $region88: #{discriminator_forward.1} parent=1 // pred_region
      %176 = dma.done [#allocation14], 16
    $region89: #{discriminator_forward.1} parent=1 // pred_fallthru
      _
    // Predicated region
    $region90: #{discriminator_forward.1} parent=1 // pred_check
      _
    $region91: #{discriminator_forward.1} parent=1 // pred_check_branch
      %178 = sbr.rel (0) target = $region93
    $region92: #{discriminator_forward.1} parent=1 // pred_region
      %179 = dma.done [#allocation17], 1024
    $region93: #{discriminator_forward.1} parent=1 // pred_fallthru
      _
    // Predicated region
    $region94: #{discriminator_forward.1} parent=1 // pred_check
      _
    $region95: #{discriminator_forward.1} parent=1 // pred_check_branch
      %181 = sbr.rel (0) target = $region97
    $region96: #{discriminator_forward.1} parent=1 // pred_region
      %182 = dma.done [#allocation17], 16
    $region97: #{discriminator_forward.1} parent=1 // pred_fallthru
      _
    %v184 = vld [vmem:[%s0] sm:$0xff]
    %v185 = vld [vmem:[%s0 + $0x8] sm:$0xff]
    %v186 = vld [vmem:[%s0 + $0x10] sm:$0xff]
    %v187 = vld [vmem:[%s0 + $0x18] sm:$0xff]
    %v188 = vld [vmem:[%s0 + $0x20] sm:$0xff]
    %v189 = vld [vmem:[%s0 + $0x28] sm:$0xff]
    %v190 = vld [vmem:[%s0 + $0x30] sm:$0xff]
    %v191 = vld [vmem:[%s0 + $0x38] sm:$0xff]
    %v192 = vld [vmem:[%s0 + $0x40] sm:$0xff]
    %v193 = vld [vmem:[%s0 + $0x48] sm:$0xff]
    %v194 = vld [vmem:[%s0 + $0x50] sm:$0xff]
    %v195 = vld [vmem:[%s0 + $0x58] sm:$0xff]
    %v196 = vld [vmem:[%s0 + $0x60] sm:$0xff]
    %v197 = vld [vmem:[%s0 + $0x68] sm:$0xff]
    %v198 = vld [vmem:[%s0 + $0x70] sm:$0xff]
    %v199 = vld [vmem:[%s0 + $0x78] sm:$0xff]
    %v200 = vld [vmem:[%s0 + $0x80] sm:$0xff]
    %v201 = vld [vmem:[%s0 + $0x88] sm:$0xff]
    %v202 = vld [vmem:[%s0 + $0x90] sm:$0xff]
    %v203 = vld [vmem:[%s0 + $0x98] sm:$0xff]
    %v204 = vld [vmem:[%s0 + $0xa0] sm:$0xff]
    %v205 = vld [vmem:[%s0 + $0xa8] sm:$0xff]
    %v206 = vld [vmem:[%s0 + $0xb0] sm:$0xff]
    %v207 = vld [vmem:[%s0 + $0xb8] sm:$0xff]
    %v208 = vld [vmem:[%s0 + $0xc0] sm:$0xff]
    %v209 = vld [vmem:[%s0 + $0xc8] sm:$0xff]
    %v210 = vld [vmem:[%s0 + $0xd0] sm:$0xff]
    %v211 = vld [vmem:[%s0 + $0xd8] sm:$0xff]
    %v212 = vld [vmem:[%s0 + $0xe0] sm:$0xff]
    %v213 = vld [vmem:[%s0 + $0xe8] sm:$0xff]
    %v214 = vld [vmem:[%s0 + $0xf0] sm:$0xff]
    %v215 = vld [vmem:[%s0 + $0xf8] sm:$0xff]
    %v216 = vld [vmem:[%s0 + $0x100] sm:$0xff]
    %v217 = vld [vmem:[%s0 + $0x108] sm:$0xff]
    %v218 = vld [vmem:[%s0 + $0x110] sm:$0xff]
    %v219 = vld [vmem:[%s0 + $0x118] sm:$0xff]
    %v220 = vld [vmem:[%s0 + $0x120] sm:$0xff]
    %v221 = vld [vmem:[%s0 + $0x128] sm:$0xff]
    %v222 = vpack.c.bf16 %v203, %v184
    %v223 = vpack.c.bf16 %v204, %v185
    %v224 = vpack.c.bf16 %v205, %v186
    %v225 = vpack.c.bf16 %v206, %v187
    %v226 = vpack.c.bf16 %v207, %v188
    %v227 = vpack.c.bf16 %v208, %v189
    %v228 = vpack.c.bf16 %v209, %v190
    %v229 = vpack.c.bf16 %v210, %v191
    %v230 = vpack.c.bf16 %v211, %v192
    %v231 = vpack.c.bf16 %v212, %v193
    %v232 = vpack.c.bf16 %v213, %v194
    %v233 = vpack.c.bf16 %v214, %v195
    %v234 = vpack.c.bf16 %v215, %v196
    %v235 = vpack.c.bf16 %v216, %v197
    %v236 = vpack.c.bf16 %v217, %v198
    %v237 = vpack.c.bf16 %v218, %v199
    %v238 = vpack.c.bf16 %v219, %v200
    %v239 = vpack.c.bf16 %v220, %v201
    %v240 = vpack.c.bf16 %v221, %v202
    %v241 = vld [vmem:[%s1] sm:$0xff]
    %v242 = vld [vmem:[%s1 + $0x8] sm:$0xff]
    %v243 = vpack.c.bf16 %v242, %v241
    %v244 = vld [vmem:[#allocation2] sm:$0xff]
    %v245 = vld [vmem:[#allocation2 + $0x8] sm:$0xff]
    %v246 = vld [vmem:[#allocation2 + $0x10] sm:$0xff]
    %v247 = vld [vmem:[#allocation2 + $0x18] sm:$0xff]
    %v248 = vld [vmem:[#allocation2 + $0x20] sm:$0xff]
    %v249 = vld [vmem:[#allocation2 + $0x28] sm:$0xff]
    %v250 = vld [vmem:[#allocation2 + $0x30] sm:$0xff]
    %v251 = vld [vmem:[#allocation2 + $0x38] sm:$0xff]
    %v252 = vld [vmem:[#allocation2 + $0x40] sm:$0xff]
    %v253 = vld [vmem:[#allocation2 + $0x48] sm:$0xff]
    %v254 = vld [vmem:[#allocation2 + $0x50] sm:$0xff]
    %v255 = vld [vmem:[#allocation2 + $0x58] sm:$0xff]
    %v256 = vld [vmem:[#allocation2 + $0x60] sm:$0xff]
    %v257 = vld [vmem:[#allocation2 + $0x68] sm:$0xff]
    %v258 = vld [vmem:[#allocation2 + $0x70] sm:$0xff]
    %v259 = vld [vmem:[#allocation2 + $0x78] sm:$0xff]
    %v260 = vld [vmem:[#allocation2 + $0x80] sm:$0xff]
    %v261 = vld [vmem:[#allocation2 + $0x88] sm:$0xff]
    %v262 = vld [vmem:[#allocation2 + $0x90] sm:$0xff]
    %v263 = vld [vmem:[#allocation2 + $0x98] sm:$0xff]
    %v264 = vld [vmem:[#allocation2 + $0xa0] sm:$0xff]
    %v265 = vld [vmem:[#allocation2 + $0xa8] sm:$0xff]
    %v266 = vld [vmem:[#allocation2 + $0xb0] sm:$0xff]
    %v267 = vld [vmem:[#allocation2 + $0xb8] sm:$0xff]
    %v268 = vld [vmem:[#allocation2 + $0xc0] sm:$0xff]
    %v269 = vld [vmem:[#allocation2 + $0xc8] sm:$0xff]
    %v270 = vld [vmem:[#allocation2 + $0xd0] sm:$0xff]
    %v271 = vld [vmem:[#allocation2 + $0xd8] sm:$0xff]
    %v272 = vld [vmem:[#allocation2 + $0xe0] sm:$0xff]
    %v273 = vld [vmem:[#allocation2 + $0xe8] sm:$0xff]
    %v274 = vld [vmem:[#allocation2 + $0xf0] sm:$0xff]
    %v275 = vld [vmem:[#allocation2 + $0xf8] sm:$0xff]
    %v276 = vld [vmem:[#allocation2 + $0x100] sm:$0xff]
    %v277 = vld [vmem:[#allocation2 + $0x108] sm:$0xff]
    %v278 = vld [vmem:[#allocation2 + $0x110] sm:$0xff]
    %v279 = vld [vmem:[#allocation2 + $0x118] sm:$0xff]
    %v280 = vld [vmem:[#allocation2 + $0x120] sm:$0xff]
    %v281 = vld [vmem:[#allocation2 + $0x128] sm:$0xff]
    %v282 = vld [vmem:[#allocation2 + $0x130] sm:$0xff]
    %v283 = vld [vmem:[#allocation2 + $0x138] sm:$0xff]
    %v284 = vld [vmem:[#allocation2 + $0x140] sm:$0xff]
    %v285 = vld [vmem:[#allocation2 + $0x148] sm:$0xff]
    %v286 = vld [vmem:[#allocation2 + $0x150] sm:$0xff]
    %v287 = vld [vmem:[#allocation2 + $0x158] sm:$0xff]
    %v288 = vld [vmem:[#allocation2 + $0x160] sm:$0xff]
    %v289 = vld [vmem:[#allocation2 + $0x168] sm:$0xff]
    %v290 = vld [vmem:[#allocation2 + $0x170] sm:$0xff]
    %v291 = vld [vmem:[#allocation2 + $0x178] sm:$0xff]
    %v292 = vld [vmem:[#allocation2 + $0x180] sm:$0xff]
    %v293 = vld [vmem:[#allocation2 + $0x188] sm:$0xff]
    %v294 = vld [vmem:[#allocation2 + $0x190] sm:$0xff]
    %v295 = vld [vmem:[#allocation2 + $0x198] sm:$0xff]
    %v296 = vld [vmem:[#allocation2 + $0x1a0] sm:$0xff]
    %v297 = vld [vmem:[#allocation2 + $0x1a8] sm:$0xff]
    %v298 = vld [vmem:[#allocation2 + $0x1b0] sm:$0xff]
    %v299 = vld [vmem:[#allocation2 + $0x1b8] sm:$0xff]
    %v300 = vld [vmem:[#allocation2 + $0x1c0] sm:$0xff]
    %v301 = vld [vmem:[#allocation2 + $0x1c8] sm:$0xff]
    %v302 = vld [vmem:[#allocation2 + $0x1d0] sm:$0xff]
    %v303 = vld [vmem:[#allocation2 + $0x1d8] sm:$0xff]
    %v304 = vld [vmem:[#allocation2 + $0x1e0] sm:$0xff]
    %v305 = vld [vmem:[#allocation2 + $0x1e8] sm:$0xff]
    %v306 = vld [vmem:[#allocation2 + $0x1f0] sm:$0xff]
    %v307 = vld [vmem:[#allocation2 + $0x1f8] sm:$0xff]
    %v308 = vld [vmem:[#allocation2 + $0x200] sm:$0xff]
    %v309 = vld [vmem:[#allocation2 + $0x208] sm:$0xff]
    %v310 = vld [vmem:[#allocation2 + $0x210] sm:$0xff]
    %v311 = vld [vmem:[#allocation2 + $0x218] sm:$0xff]
    %v312 = vld [vmem:[#allocation2 + $0x220] sm:$0xff]
    %v313 = vld [vmem:[#allocation2 + $0x228] sm:$0xff]
    %v314 = vld [vmem:[#allocation2 + $0x230] sm:$0xff]
    %v315 = vld [vmem:[#allocation2 + $0x238] sm:$0xff]
    %v316 = vld [vmem:[#allocation2 + $0x240] sm:$0xff]
    %v317 = vld [vmem:[#allocation2 + $0x248] sm:$0xff]
    %v318 = vld [vmem:[#allocation2 + $0x250] sm:$0xff]
    %v319 = vld [vmem:[#allocation2 + $0x258] sm:$0xff]
    %v320 = vld [vmem:[#allocation2 + $0x260] sm:$0xff]
    %v321 = vld [vmem:[#allocation2 + $0x268] sm:$0xff]
    %v322 = vld [vmem:[#allocation2 + $0x270] sm:$0xff]
    %v323 = vld [vmem:[#allocation2 + $0x278] sm:$0xff]
    %v324 = vld [vmem:[#allocation2 + $0x280] sm:$0xff]
    %v325 = vld [vmem:[#allocation2 + $0x288] sm:$0xff]
    %v326 = vld [vmem:[#allocation2 + $0x290] sm:$0xff]
    %v327 = vld [vmem:[#allocation2 + $0x298] sm:$0xff]
    %v328 = vld [vmem:[#allocation2 + $0x2a0] sm:$0xff]
    %v329 = vld [vmem:[#allocation2 + $0x2a8] sm:$0xff]
    %v330 = vld [vmem:[#allocation2 + $0x2b0] sm:$0xff]
    %v331 = vld [vmem:[#allocation2 + $0x2b8] sm:$0xff]
    %v332 = vld [vmem:[#allocation2 + $0x2c0] sm:$0xff]
    %v333 = vld [vmem:[#allocation2 + $0x2c8] sm:$0xff]
    %v334 = vld [vmem:[#allocation2 + $0x2d0] sm:$0xff]
    %v335 = vld [vmem:[#allocation2 + $0x2d8] sm:$0xff]
    %v336 = vld [vmem:[#allocation2 + $0x2e0] sm:$0xff]
    %v337 = vld [vmem:[#allocation2 + $0x2e8] sm:$0xff]
    %v338 = vld [vmem:[#allocation2 + $0x2f0] sm:$0xff]
    %v339 = vld [vmem:[#allocation2 + $0x2f8] sm:$0xff]
    %v340 = vld [vmem:[#allocation2 + $0x300] sm:$0xff]
    %v341 = vld [vmem:[#allocation2 + $0x308] sm:$0xff]
    %v342 = vld [vmem:[#allocation2 + $0x310] sm:$0xff]
    %v343 = vld [vmem:[#allocation2 + $0x318] sm:$0xff]
    %v344 = vld [vmem:[#allocation2 + $0x320] sm:$0xff]
    %v345 = vld [vmem:[#allocation2 + $0x328] sm:$0xff]
    %v346 = vld [vmem:[#allocation2 + $0x330] sm:$0xff]
    %v347 = vld [vmem:[#allocation2 + $0x338] sm:$0xff]
    %v348 = vld [vmem:[#allocation2 + $0x340] sm:$0xff]
    %v349 = vld [vmem:[#allocation2 + $0x348] sm:$0xff]
    %v350 = vld [vmem:[#allocation2 + $0x350] sm:$0xff]
    %v351 = vld [vmem:[#allocation2 + $0x358] sm:$0xff]
    %v352 = vld [vmem:[#allocation2 + $0x360] sm:$0xff]
    %v353 = vld [vmem:[#allocation2 + $0x368] sm:$0xff]
    %v354 = vld [vmem:[#allocation2 + $0x370] sm:$0xff]
    %v355 = vld [vmem:[#allocation2 + $0x378] sm:$0xff]
    %v356 = vld [vmem:[#allocation2 + $0x380] sm:$0xff]
    %v357 = vld [vmem:[#allocation2 + $0x388] sm:$0xff]
    %v358 = vld [vmem:[#allocation2 + $0x390] sm:$0xff]
    %v359 = vld [vmem:[#allocation2 + $0x398] sm:$0xff]
    %v360 = vld [vmem:[#allocation2 + $0x3a0] sm:$0xff]
    %v361 = vld [vmem:[#allocation2 + $0x3a8] sm:$0xff]
    %v362 = vld [vmem:[#allocation2 + $0x3b0] sm:$0xff]
    %v363 = vld [vmem:[#allocation2 + $0x3b8] sm:$0xff]
    %v364 = vld [vmem:[#allocation2 + $0x3c0] sm:$0xff]
    %v365 = vld [vmem:[#allocation2 + $0x3c8] sm:$0xff]
    %v366 = vld [vmem:[#allocation2 + $0x3d0] sm:$0xff]
    %v367 = vld [vmem:[#allocation2 + $0x3d8] sm:$0xff]
    %v368 = vld [vmem:[#allocation2 + $0x3e0] sm:$0xff]
    %v369 = vld [vmem:[#allocation2 + $0x3e8] sm:$0xff]
    %v370 = vld [vmem:[#allocation2 + $0x3f0] sm:$0xff]
    %v371 = vld [vmem:[#allocation2 + $0x3f8] sm:$0xff]
    %v372 = vld [vmem:[#allocation2 + $0x400] sm:$0xff]
    %v373 = vld [vmem:[#allocation2 + $0x408] sm:$0xff]
    %v374 = vld [vmem:[#allocation2 + $0x410] sm:$0xff]
    %v375 = vld [vmem:[#allocation2 + $0x418] sm:$0xff]
    %v376 = vld [vmem:[#allocation2 + $0x420] sm:$0xff]
    %v377 = vld [vmem:[#allocation2 + $0x428] sm:$0xff]
    %v378 = vld [vmem:[#allocation2 + $0x430] sm:$0xff]
    %v379 = vld [vmem:[#allocation2 + $0x438] sm:$0xff]
    %v380 = vld [vmem:[#allocation2 + $0x440] sm:$0xff]
    %v381 = vld [vmem:[#allocation2 + $0x448] sm:$0xff]
    %v382 = vld [vmem:[#allocation2 + $0x450] sm:$0xff]
    %v383 = vld [vmem:[#allocation2 + $0x458] sm:$0xff]
    %v384 = vld [vmem:[#allocation2 + $0x460] sm:$0xff]
    %v385 = vld [vmem:[#allocation2 + $0x468] sm:$0xff]
    %v386 = vld [vmem:[#allocation2 + $0x470] sm:$0xff]
    %v387 = vld [vmem:[#allocation2 + $0x478] sm:$0xff]
    %v388 = vld [vmem:[#allocation2 + $0x480] sm:$0xff]
    %v389 = vld [vmem:[#allocation2 + $0x488] sm:$0xff]
    %v390 = vld [vmem:[#allocation2 + $0x490] sm:$0xff]
    %v391 = vld [vmem:[#allocation2 + $0x498] sm:$0xff]
    %v392 = vld [vmem:[#allocation2 + $0x4a0] sm:$0xff]
    %v393 = vld [vmem:[#allocation2 + $0x4a8] sm:$0xff]
    %v394 = vld [vmem:[#allocation2 + $0x4b0] sm:$0xff]
    %v395 = vld [vmem:[#allocation2 + $0x4b8] sm:$0xff]
    %v396 = vld [vmem:[#allocation2 + $0x4c0] sm:$0xff]
    %v397 = vld [vmem:[#allocation2 + $0x4c8] sm:$0xff]
    %v398 = vld [vmem:[#allocation2 + $0x4d0] sm:$0xff]
    %v399 = vld [vmem:[#allocation2 + $0x4d8] sm:$0xff]
    %v400 = vld [vmem:[#allocation2 + $0x4e0] sm:$0xff]
    %v401 = vld [vmem:[#allocation2 + $0x4e8] sm:$0xff]
    %v402 = vld [vmem:[#allocation2 + $0x4f0] sm:$0xff]
    %v403 = vld [vmem:[#allocation2 + $0x4f8] sm:$0xff]
    %v404 = vld [vmem:[#allocation2 + $0x500] sm:$0xff]
    %v405 = vld [vmem:[#allocation2 + $0x508] sm:$0xff]
    %v406 = vld [vmem:[#allocation2 + $0x510] sm:$0xff]
    %v407 = vld [vmem:[#allocation2 + $0x518] sm:$0xff]
    %v408 = vld [vmem:[#allocation2 + $0x520] sm:$0xff]
    %v409 = vld [vmem:[#allocation2 + $0x528] sm:$0xff]
    %v410 = vld [vmem:[#allocation2 + $0x530] sm:$0xff]
    %v411 = vld [vmem:[#allocation2 + $0x538] sm:$0xff]
    %v412 = vld [vmem:[#allocation2 + $0x540] sm:$0xff]
    %v413 = vld [vmem:[#allocation2 + $0x548] sm:$0xff]
    %v414 = vld [vmem:[#allocation2 + $0x550] sm:$0xff]
    %v415 = vld [vmem:[#allocation2 + $0x558] sm:$0xff]
    %v416 = vld [vmem:[#allocation2 + $0x560] sm:$0xff]
    %v417 = vld [vmem:[#allocation2 + $0x568] sm:$0xff]
    %v418 = vld [vmem:[#allocation2 + $0x570] sm:$0xff]
    %v419 = vld [vmem:[#allocation2 + $0x578] sm:$0xff]
    %v420 = vld [vmem:[#allocation2 + $0x580] sm:$0xff]
    %v421 = vld [vmem:[#allocation2 + $0x588] sm:$0xff]
    %v422 = vld [vmem:[#allocation2 + $0x590] sm:$0xff]
    %v423 = vld [vmem:[#allocation2 + $0x598] sm:$0xff]
    %v424 = vld [vmem:[#allocation2 + $0x5a0] sm:$0xff]
    %v425 = vld [vmem:[#allocation2 + $0x5a8] sm:$0xff]
    %v426 = vld [vmem:[#allocation2 + $0x5b0] sm:$0xff]
    %v427 = vld [vmem:[#allocation2 + $0x5b8] sm:$0xff]
    %v428 = vld [vmem:[#allocation2 + $0x5c0] sm:$0xff]
    %v429 = vld [vmem:[#allocation2 + $0x5c8] sm:$0xff]
    %v430 = vld [vmem:[#allocation2 + $0x5d0] sm:$0xff]
    %v431 = vld [vmem:[#allocation2 + $0x5d8] sm:$0xff]
    %v432 = vld [vmem:[#allocation2 + $0x5e0] sm:$0xff]
    %v433 = vld [vmem:[#allocation2 + $0x5e8] sm:$0xff]
    %v434 = vld [vmem:[#allocation2 + $0x5f0] sm:$0xff]
    %v435 = vld [vmem:[#allocation2 + $0x5f8] sm:$0xff]
    %v436 = vld [vmem:[#allocation2 + $0x600] sm:$0xff]
    %v437 = vld [vmem:[#allocation2 + $0x608] sm:$0xff]
    %v438 = vld [vmem:[#allocation2 + $0x610] sm:$0xff]
    %v439 = vld [vmem:[#allocation2 + $0x618] sm:$0xff]
    %v440 = vld [vmem:[#allocation2 + $0x620] sm:$0xff]
    %v441 = vld [vmem:[#allocation2 + $0x628] sm:$0xff]
    %v442 = vld [vmem:[#allocation2 + $0x630] sm:$0xff]
    %v443 = vld [vmem:[#allocation2 + $0x638] sm:$0xff]
    %v444 = vld [vmem:[#allocation2 + $0x640] sm:$0xff]
    %v445 = vld [vmem:[#allocation2 + $0x648] sm:$0xff]
    %v446 = vld [vmem:[#allocation2 + $0x650] sm:$0xff]
    %v447 = vld [vmem:[#allocation2 + $0x658] sm:$0xff]
    %v448 = vld [vmem:[#allocation2 + $0x660] sm:$0xff]
    %v449 = vld [vmem:[#allocation2 + $0x668] sm:$0xff]
    %v450 = vld [vmem:[#allocation2 + $0x670] sm:$0xff]
    %v451 = vld [vmem:[#allocation2 + $0x678] sm:$0xff]
    %v452 = vld [vmem:[#allocation2 + $0x680] sm:$0xff]
    %v453 = vld [vmem:[#allocation2 + $0x688] sm:$0xff]
    %v454 = vld [vmem:[#allocation2 + $0x690] sm:$0xff]
    %v455 = vld [vmem:[#allocation2 + $0x698] sm:$0xff]
    %v456 = vld [vmem:[#allocation2 + $0x6a0] sm:$0xff]
    %v457 = vld [vmem:[#allocation2 + $0x6a8] sm:$0xff]
    %v458 = vld [vmem:[#allocation2 + $0x6b0] sm:$0xff]
    %v459 = vld [vmem:[#allocation2 + $0x6b8] sm:$0xff]
    %v460 = vld [vmem:[#allocation2 + $0x6c0] sm:$0xff]
    %v461 = vld [vmem:[#allocation2 + $0x6c8] sm:$0xff]
    %v462 = vld [vmem:[#allocation2 + $0x6d0] sm:$0xff]
    %v463 = vld [vmem:[#allocation2 + $0x6d8] sm:$0xff]
    %v464 = vld [vmem:[#allocation2 + $0x6e0] sm:$0xff]
    %v465 = vld [vmem:[#allocation2 + $0x6e8] sm:$0xff]
    %v466 = vld [vmem:[#allocation2 + $0x6f0] sm:$0xff]
    %v467 = vld [vmem:[#allocation2 + $0x6f8] sm:$0xff]
    %v468 = vld [vmem:[#allocation2 + $0x700] sm:$0xff]
    %v469 = vld [vmem:[#allocation2 + $0x708] sm:$0xff]
    %v470 = vld [vmem:[#allocation2 + $0x710] sm:$0xff]
    %v471 = vld [vmem:[#allocation2 + $0x718] sm:$0xff]
    %v472 = vld [vmem:[#allocation2 + $0x720] sm:$0xff]
    %v473 = vld [vmem:[#allocation2 + $0x728] sm:$0xff]
    %v474 = vld [vmem:[#allocation2 + $0x730] sm:$0xff]
    %v475 = vld [vmem:[#allocation2 + $0x738] sm:$0xff]
    %v476 = vld [vmem:[#allocation2 + $0x740] sm:$0xff]
    %v477 = vld [vmem:[#allocation2 + $0x748] sm:$0xff]
    %v478 = vld [vmem:[#allocation2 + $0x750] sm:$0xff]
    %v479 = vld [vmem:[#allocation2 + $0x758] sm:$0xff]
    %v480 = vld [vmem:[#allocation2 + $0x760] sm:$0xff]
    %v481 = vld [vmem:[#allocation2 + $0x768] sm:$0xff]
    %v482 = vld [vmem:[#allocation2 + $0x770] sm:$0xff]
    %v483 = vld [vmem:[#allocation2 + $0x778] sm:$0xff]
    %v484 = vld [vmem:[#allocation2 + $0x780] sm:$0xff]
    %v485 = vld [vmem:[#allocation2 + $0x788] sm:$0xff]
    %v486 = vld [vmem:[#allocation2 + $0x790] sm:$0xff]
    %v487 = vld [vmem:[#allocation2 + $0x798] sm:$0xff]
    %v488 = vld [vmem:[#allocation2 + $0x7a0] sm:$0xff]
    %v489 = vld [vmem:[#allocation2 + $0x7a8] sm:$0xff]
    %v490 = vld [vmem:[#allocation2 + $0x7b0] sm:$0xff]
    %v491 = vld [vmem:[#allocation2 + $0x7b8] sm:$0xff]
    %v492 = vld [vmem:[#allocation2 + $0x7c0] sm:$0xff]
    %v493 = vld [vmem:[#allocation2 + $0x7c8] sm:$0xff]
    %v494 = vld [vmem:[#allocation2 + $0x7d0] sm:$0xff]
    %v495 = vld [vmem:[#allocation2 + $0x7d8] sm:$0xff]
    %v496 = vld [vmem:[#allocation2 + $0x7e0] sm:$0xff]
    %v497 = vld [vmem:[#allocation2 + $0x7e8] sm:$0xff]
    %v498 = vld [vmem:[#allocation2 + $0x7f0] sm:$0xff]
    %v499 = vld [vmem:[#allocation2 + $0x7f8] sm:$0xff]
    %v500 = vld [vmem:[#allocation2 + $0x800] sm:$0xff]
    %v501 = vld [vmem:[#allocation2 + $0x808] sm:$0xff]
    %v502 = vld [vmem:[#allocation2 + $0x810] sm:$0xff]
    %v503 = vld [vmem:[#allocation2 + $0x818] sm:$0xff]
    %v504 = vld [vmem:[#allocation2 + $0x820] sm:$0xff]
    %v505 = vld [vmem:[#allocation2 + $0x828] sm:$0xff]
    %v506 = vld [vmem:[#allocation2 + $0x830] sm:$0xff]
    %v507 = vld [vmem:[#allocation2 + $0x838] sm:$0xff]
    %v508 = vld [vmem:[#allocation2 + $0x840] sm:$0xff]
    %v509 = vld [vmem:[#allocation2 + $0x848] sm:$0xff]
    %v510 = vld [vmem:[#allocation2 + $0x850] sm:$0xff]
    %v511 = vld [vmem:[#allocation2 + $0x858] sm:$0xff]
    %v512 = vld [vmem:[#allocation2 + $0x860] sm:$0xff]
    %v513 = vld [vmem:[#allocation2 + $0x868] sm:$0xff]
    %v514 = vld [vmem:[#allocation2 + $0x870] sm:$0xff]
    %v515 = vld [vmem:[#allocation2 + $0x878] sm:$0xff]
    %v516 = vld [vmem:[#allocation2 + $0x880] sm:$0xff]
    %v517 = vld [vmem:[#allocation2 + $0x888] sm:$0xff]
    %v518 = vld [vmem:[#allocation2 + $0x890] sm:$0xff]
    %v519 = vld [vmem:[#allocation2 + $0x898] sm:$0xff]
    %v520 = vld [vmem:[#allocation2 + $0x8a0] sm:$0xff]
    %v521 = vld [vmem:[#allocation2 + $0x8a8] sm:$0xff]
    %v522 = vld [vmem:[#allocation2 + $0x8b0] sm:$0xff]
    %v523 = vld [vmem:[#allocation2 + $0x8b8] sm:$0xff]
    %v524 = vld [vmem:[#allocation2 + $0x8c0] sm:$0xff]
    %v525 = vld [vmem:[#allocation2 + $0x8c8] sm:$0xff]
    %v526 = vld [vmem:[#allocation2 + $0x8d0] sm:$0xff]
    %v527 = vld [vmem:[#allocation2 + $0x8d8] sm:$0xff]
    %v528 = vld [vmem:[#allocation2 + $0x8e0] sm:$0xff]
    %v529 = vld [vmem:[#allocation2 + $0x8e8] sm:$0xff]
    %v530 = vld [vmem:[#allocation2 + $0x8f0] sm:$0xff]
    %v531 = vld [vmem:[#allocation2 + $0x8f8] sm:$0xff]
    %v532 = vld [vmem:[#allocation2 + $0x900] sm:$0xff]
    %v533 = vld [vmem:[#allocation2 + $0x908] sm:$0xff]
    %v534 = vld [vmem:[#allocation2 + $0x910] sm:$0xff]
    %v535 = vld [vmem:[#allocation2 + $0x918] sm:$0xff]
    %v536 = vld [vmem:[#allocation2 + $0x920] sm:$0xff]
    %v537 = vld [vmem:[#allocation2 + $0x928] sm:$0xff]
    %v538 = vld [vmem:[#allocation4] sm:$0xff]
    %v539 = vld [vmem:[#allocation4 + $0x8] sm:$0xff]
    %v540 = vld [vmem:[#allocation4 + $0x10] sm:$0xff]
    %v541 = vld [vmem:[#allocation4 + $0x18] sm:$0xff]
    %v542 = vld [vmem:[#allocation4 + $0x20] sm:$0xff]
    %v543 = vld [vmem:[#allocation4 + $0x28] sm:$0xff]
    %v544 = vld [vmem:[#allocation4 + $0x30] sm:$0xff]
    %v545 = vld [vmem:[#allocation4 + $0x38] sm:$0xff]
    %v546 = vld [vmem:[#allocation4 + $0x40] sm:$0xff]
    %v547 = vld [vmem:[#allocation4 + $0x48] sm:$0xff]
    %v548 = vld [vmem:[#allocation4 + $0x50] sm:$0xff]
    %v549 = vld [vmem:[#allocation4 + $0x58] sm:$0xff]
    %v550 = vld [vmem:[#allocation4 + $0x60] sm:$0xff]
    %v551 = vld [vmem:[#allocation4 + $0x68] sm:$0xff]
    %v552 = vld [vmem:[#allocation4 + $0x70] sm:$0xff]
    %v553 = vld [vmem:[#allocation4 + $0x78] sm:$0xff]
    %v570 = vunpack.c.l.b16 %v538
    %v571 = vunpack.c.h.b16 %v538
    %v572 = vunpack.c.l.b16 %v539
    %v573 = vunpack.c.h.b16 %v539
    %v574 = vunpack.c.l.b16 %v540
    %v575 = vunpack.c.h.b16 %v540
    %v576 = vunpack.c.l.b16 %v541
    %v577 = vunpack.c.h.b16 %v541
    %v578 = vunpack.c.l.b16 %v542
    %v579 = vunpack.c.h.b16 %v542
    %v580 = vunpack.c.l.b16 %v543
    %v581 = vunpack.c.h.b16 %v543
    %v582 = vunpack.c.l.b16 %v544
    %v583 = vunpack.c.h.b16 %v544
    %v584 = vunpack.c.l.b16 %v545
    %v585 = vunpack.c.h.b16 %v545
    %v586 = vunpack.c.l.b16 %v546
    %v587 = vunpack.c.h.b16 %v546
    %v588 = vunpack.c.l.b16 %v547
    %v589 = vunpack.c.h.b16 %v547
    %v590 = vunpack.c.l.b16 %v548
    %v591 = vunpack.c.h.b16 %v548
    %v592 = vunpack.c.l.b16 %v549
    %v593 = vunpack.c.h.b16 %v549
    %v594 = vunpack.c.l.b16 %v550
    %v595 = vunpack.c.h.b16 %v550
    %v596 = vunpack.c.l.b16 %v551
    %v597 = vunpack.c.h.b16 %v551
    %v598 = vunpack.c.l.b16 %v552
    %v599 = vunpack.c.h.b16 %v552
    %v600 = vunpack.c.l.b16 %v553
    %v601 = vunpack.c.h.b16 %v553
    %v602 = vpack.c.b16 %v572, %v570
    %v603 = vpack.c.b16 %v573, %v571
    %v604 = vpack.c.b16 %v576, %v574
    %v605 = vpack.c.b16 %v577, %v575
    %v606 = vpack.c.b16 %v580, %v578
    %v607 = vpack.c.b16 %v581, %v579
    %v608 = vpack.c.b16 %v584, %v582
    %v609 = vpack.c.b16 %v585, %v583
    %v610 = vpack.c.b16 %v588, %v586
    %v611 = vpack.c.b16 %v589, %v587
    %v612 = vpack.c.b16 %v592, %v590
    %v613 = vpack.c.b16 %v593, %v591
    %v614 = vpack.c.b16 %v596, %v594
    %v615 = vpack.c.b16 %v597, %v595
    %v616 = vpack.c.b16 %v600, %v598
    %v617 = vpack.c.b16 %v601, %v599
    %634 = vmatprep.subr.bf16.mxu0 %v603
    %635 = vmatpush1.bf16.msra.mxu0 %v602
    %636 = vmatprep.subr.bf16.mxu0 %v605
    %637 = vmatpush1.bf16.msra.mxu0 %v604
    %638 = vmatprep.subr.bf16.mxu0 %v607
    %639 = vmatpush1.bf16.msra.mxu0 %v606
    %640 = vmatprep.subr.bf16.mxu0 %v609
    %641 = vmatpush1.bf16.msra.mxu0 %v608
    %642 = vmatprep.subr.bf16.mxu0 %v611
    %643 = vmatpush1.bf16.msra.mxu0 %v610
    %644 = vmatprep.subr.bf16.mxu0 %v613
    %645 = vmatpush1.bf16.msra.mxu0 %v612
    %646 = vmatprep.subr.bf16.mxu0 %v615
    %647 = vmatpush1.bf16.msra.mxu0 %v614
    %648 = vmatprep.subr.bf16.mxu0 %v617
    %649 = vmatpush1.bf16.msra.mxu0 %v616
    %650 = vmatprep.subr.bf16.mxu0 0
    %651 = vmatpush1.bf16.msra.mxu0 0
    %652 = vmatprep.subr.bf16.mxu0 0
    %653 = vmatpush1.bf16.msra.mxu0 0
    %654 = vmatprep.subr.bf16.mxu0 0
    %655 = vmatpush1.bf16.msra.mxu0 0
    %656 = vmatprep.subr.bf16.mxu0 0
    %657 = vmatpush1.bf16.msra.mxu0 0
    %658 = vmatprep.subr.bf16.mxu0 0
    %659 = vmatpush1.bf16.msra.mxu0 0
    %660 = vmatprep.subr.bf16.mxu0 0
    %661 = vmatpush1.bf16.msra.mxu0 0
    %662 = vmatprep.subr.bf16.mxu0 0
    %663 = vmatpush1.bf16.msra.mxu0 0
    %664 = vmatprep.subr.bf16.mxu0 0
    %665 = vmatpush1.bf16.msra.mxu0 0
    %666 = vmatprep.mubr.bf16.mxu0 0
    %667 = vmatmul.mubr.bf16.gmra.mrb[0].mxu0 %v243
    %v668 = vpop.f32.mrb[0].mxu0
    %v669 = vadd.f32 0.0, %v668
    %v670 = vpop.f32.mrb[0].mxu0
    %v671 = vadd.f32 0.0, %v670
    %v672 = vpop.f32.mrb[0].mxu0
    %v673 = vadd.f32 0.0, %v672
    %v674 = vpop.f32.mrb[0].mxu0
    %v675 = vadd.f32 0.0, %v674
    %676 = vdwg.mxu0
    %v971 = vunpack.c.l.b16 %v244
    %v972 = vunpack.c.h.b16 %v244
    %v973 = vunpack.c.l.b16 %v245
    %v974 = vunpack.c.h.b16 %v245
    %v975 = vunpack.c.l.b16 %v246
    %v976 = vunpack.c.h.b16 %v246
    %v977 = vunpack.c.l.b16 %v247
    %v978 = vunpack.c.h.b16 %v247
    %v979 = vunpack.c.l.b16 %v248
    %v980 = vunpack.c.h.b16 %v248
    %v981 = vunpack.c.l.b16 %v249
    %v982 = vunpack.c.h.b16 %v249
    %v983 = vunpack.c.l.b16 %v250
    %v984 = vunpack.c.h.b16 %v250
    %v985 = vunpack.c.l.b16 %v251
    %v986 = vunpack.c.h.b16 %v251
    %v987 = vunpack.c.l.b16 %v252
    %v988 = vunpack.c.h.b16 %v252
    %v989 = vunpack.c.l.b16 %v253
    %v990 = vunpack.c.h.b16 %v253
    %v991 = vunpack.c.l.b16 %v254
    %v992 = vunpack.c.h.b16 %v254
    %v993 = vunpack.c.l.b16 %v255
    %v994 = vunpack.c.h.b16 %v255
    %v995 = vunpack.c.l.b16 %v256
    %v996 = vunpack.c.h.b16 %v256
    %v997 = vunpack.c.l.b16 %v257
    %v998 = vunpack.c.h.b16 %v257
    %v999 = vunpack.c.l.b16 %v258
    %v1000 = vunpack.c.h.b16 %v258
    %v1001 = vunpack.c.l.b16 %v259
    %v1002 = vunpack.c.h.b16 %v259
    %v1003 = vunpack.c.l.b16 %v260
    %v1004 = vunpack.c.h.b16 %v260
    %v1005 = vunpack.c.l.b16 %v261
    %v1006 = vunpack.c.h.b16 %v261
    %v1007 = vunpack.c.l.b16 %v262
    %v1008 = vunpack.c.h.b16 %v262
    %v1009 = vunpack.c.l.b16 %v263
    %v1010 = vunpack.c.h.b16 %v263
    %v1011 = vunpack.c.l.b16 %v264
    %v1012 = vunpack.c.h.b16 %v264
    %v1013 = vunpack.c.l.b16 %v265
    %v1014 = vunpack.c.h.b16 %v265
    %v1015 = vunpack.c.l.b16 %v266
    %v1016 = vunpack.c.h.b16 %v266
    %v1017 = vunpack.c.l.b16 %v267
    %v1018 = vunpack.c.h.b16 %v267
    %v1019 = vunpack.c.l.b16 %v268
    %v1020 = vunpack.c.h.b16 %v268
    %v1021 = vunpack.c.l.b16 %v269
    %v1022 = vunpack.c.h.b16 %v269
    %v1023 = vunpack.c.l.b16 %v270
    %v1024 = vunpack.c.h.b16 %v270
    %v1025 = vunpack.c.l.b16 %v271
    %v1026 = vunpack.c.h.b16 %v271
    %v1027 = vunpack.c.l.b16 %v272
    %v1028 = vunpack.c.h.b16 %v272
    %v1029 = vunpack.c.l.b16 %v273
    %v1030 = vunpack.c.h.b16 %v273
    %v1031 = vunpack.c.l.b16 %v274
    %v1032 = vunpack.c.h.b16 %v274
    %v1033 = vunpack.c.l.b16 %v275
    %v1034 = vunpack.c.h.b16 %v275
    %v1035 = vunpack.c.l.b16 %v276
    %v1036 = vunpack.c.h.b16 %v276
    %v1037 = vunpack.c.l.b16 %v277
    %v1038 = vunpack.c.h.b16 %v277
    %v1039 = vunpack.c.l.b16 %v278
    %v1040 = vunpack.c.h.b16 %v278
    %v1041 = vunpack.c.l.b16 %v279
    %v1042 = vunpack.c.h.b16 %v279
    %v1043 = vunpack.c.l.b16 %v280
    %v1044 = vunpack.c.h.b16 %v280
    %v1045 = vunpack.c.l.b16 %v281
    %v1046 = vunpack.c.h.b16 %v281
    %v1047 = vunpack.c.l.b16 %v282
    %v1048 = vunpack.c.h.b16 %v282
    %v1049 = vunpack.c.l.b16 %v283
    %v1050 = vunpack.c.h.b16 %v283
    %v1051 = vunpack.c.l.b16 %v284
    %v1052 = vunpack.c.h.b16 %v284
    %v1053 = vunpack.c.l.b16 %v285
    %v1054 = vunpack.c.h.b16 %v285
    %v1055 = vunpack.c.l.b16 %v286
    %v1056 = vunpack.c.h.b16 %v286
    %v1057 = vunpack.c.l.b16 %v287
    %v1058 = vunpack.c.h.b16 %v287
    %v1059 = vunpack.c.l.b16 %v288
    %v1060 = vunpack.c.h.b16 %v288
    %v1061 = vunpack.c.l.b16 %v289
    %v1062 = vunpack.c.h.b16 %v289
    %v1063 = vunpack.c.l.b16 %v290
    %v1064 = vunpack.c.h.b16 %v290
    %v1065 = vunpack.c.l.b16 %v291
    %v1066 = vunpack.c.h.b16 %v291
    %v1067 = vunpack.c.l.b16 %v292
    %v1068 = vunpack.c.h.b16 %v292
    %v1069 = vunpack.c.l.b16 %v293
    %v1070 = vunpack.c.h.b16 %v293
    %v1071 = vunpack.c.l.b16 %v294
    %v1072 = vunpack.c.h.b16 %v294
    %v1073 = vunpack.c.l.b16 %v295
    %v1074 = vunpack.c.h.b16 %v295
    %v1075 = vunpack.c.l.b16 %v296
    %v1076 = vunpack.c.h.b16 %v296
    %v1077 = vunpack.c.l.b16 %v297
    %v1078 = vunpack.c.h.b16 %v297
    %v1079 = vunpack.c.l.b16 %v298
    %v1080 = vunpack.c.h.b16 %v298
    %v1081 = vunpack.c.l.b16 %v299
    %v1082 = vunpack.c.h.b16 %v299
    %v1083 = vunpack.c.l.b16 %v300
    %v1084 = vunpack.c.h.b16 %v300
    %v1085 = vunpack.c.l.b16 %v301
    %v1086 = vunpack.c.h.b16 %v301
    %v1087 = vunpack.c.l.b16 %v302
    %v1088 = vunpack.c.h.b16 %v302
    %v1089 = vunpack.c.l.b16 %v303
    %v1090 = vunpack.c.h.b16 %v303
    %v1091 = vunpack.c.l.b16 %v304
    %v1092 = vunpack.c.h.b16 %v304
    %v1093 = vunpack.c.l.b16 %v305
    %v1094 = vunpack.c.h.b16 %v305
    %v1095 = vunpack.c.l.b16 %v306
    %v1096 = vunpack.c.h.b16 %v306
    %v1097 = vunpack.c.l.b16 %v307
    %v1098 = vunpack.c.h.b16 %v307
    %v1099 = vunpack.c.l.b16 %v308
    %v1100 = vunpack.c.h.b16 %v308
    %v1101 = vunpack.c.l.b16 %v309
    %v1102 = vunpack.c.h.b16 %v309
    %v1103 = vunpack.c.l.b16 %v310
    %v1104 = vunpack.c.h.b16 %v310
    %v1105 = vunpack.c.l.b16 %v311
    %v1106 = vunpack.c.h.b16 %v311
    %v1107 = vunpack.c.l.b16 %v312
    %v1108 = vunpack.c.h.b16 %v312
    %v1109 = vunpack.c.l.b16 %v313
    %v1110 = vunpack.c.h.b16 %v313
    %v1111 = vunpack.c.l.b16 %v314
    %v1112 = vunpack.c.h.b16 %v314
    %v1113 = vunpack.c.l.b16 %v315
    %v1114 = vunpack.c.h.b16 %v315
    %v1115 = vunpack.c.l.b16 %v316
    %v1116 = vunpack.c.h.b16 %v316
    %v1117 = vunpack.c.l.b16 %v317
    %v1118 = vunpack.c.h.b16 %v317
    %v1119 = vunpack.c.l.b16 %v318
    %v1120 = vunpack.c.h.b16 %v318
    %v1121 = vunpack.c.l.b16 %v319
    %v1122 = vunpack.c.h.b16 %v319
    %v1123 = vunpack.c.l.b16 %v320
    %v1124 = vunpack.c.h.b16 %v320
    %v1125 = vunpack.c.l.b16 %v321
    %v1126 = vunpack.c.h.b16 %v321
    %v1127 = vunpack.c.l.b16 %v322
    %v1128 = vunpack.c.h.b16 %v322
    %v1129 = vunpack.c.l.b16 %v323
    %v1130 = vunpack.c.h.b16 %v323
    %v1131 = vunpack.c.l.b16 %v324
    %v1132 = vunpack.c.h.b16 %v324
    %v1133 = vunpack.c.l.b16 %v325
    %v1134 = vunpack.c.h.b16 %v325
    %v1135 = vunpack.c.l.b16 %v326
    %v1136 = vunpack.c.h.b16 %v326
    %v1137 = vunpack.c.l.b16 %v327
    %v1138 = vunpack.c.h.b16 %v327
    %v1139 = vunpack.c.l.b16 %v328
    %v1140 = vunpack.c.h.b16 %v328
    %v1141 = vunpack.c.l.b16 %v329
    %v1142 = vunpack.c.h.b16 %v329
    %v1143 = vunpack.c.l.b16 %v330
    %v1144 = vunpack.c.h.b16 %v330
    %v1145 = vunpack.c.l.b16 %v331
    %v1146 = vunpack.c.h.b16 %v331
    %v1147 = vunpack.c.l.b16 %v332
    %v1148 = vunpack.c.h.b16 %v332
    %v1149 = vunpack.c.l.b16 %v333
    %v1150 = vunpack.c.h.b16 %v333
    %v1151 = vunpack.c.l.b16 %v334
    %v1152 = vunpack.c.h.b16 %v334
    %v1153 = vunpack.c.l.b16 %v335
    %v1154 = vunpack.c.h.b16 %v335
    %v1155 = vunpack.c.l.b16 %v336
    %v1156 = vunpack.c.h.b16 %v336
    %v1157 = vunpack.c.l.b16 %v337
    %v1158 = vunpack.c.h.b16 %v337
    %v1159 = vunpack.c.l.b16 %v338
    %v1160 = vunpack.c.h.b16 %v338
    %v1161 = vunpack.c.l.b16 %v339
    %v1162 = vunpack.c.h.b16 %v339
    %v1163 = vunpack.c.l.b16 %v340
    %v1164 = vunpack.c.h.b16 %v340
    %v1165 = vunpack.c.l.b16 %v341
    %v1166 = vunpack.c.h.b16 %v341
    %v1167 = vunpack.c.l.b16 %v342
    %v1168 = vunpack.c.h.b16 %v342
    %v1169 = vunpack.c.l.b16 %v343
    %v1170 = vunpack.c.h.b16 %v343
    %v1171 = vunpack.c.l.b16 %v344
    %v1172 = vunpack.c.h.b16 %v344
    %v1173 = vunpack.c.l.b16 %v345
    %v1174 = vunpack.c.h.b16 %v345
    %v1175 = vunpack.c.l.b16 %v346
    %v1176 = vunpack.c.h.b16 %v346
    %v1177 = vunpack.c.l.b16 %v347
    %v1178 = vunpack.c.h.b16 %v347
    %v1179 = vunpack.c.l.b16 %v348
    %v1180 = vunpack.c.h.b16 %v348
    %v1181 = vunpack.c.l.b16 %v349
    %v1182 = vunpack.c.h.b16 %v349
    %v1183 = vunpack.c.l.b16 %v350
    %v1184 = vunpack.c.h.b16 %v350
    %v1185 = vunpack.c.l.b16 %v351
    %v1186 = vunpack.c.h.b16 %v351
    %v1187 = vunpack.c.l.b16 %v352
    %v1188 = vunpack.c.h.b16 %v352
    %v1189 = vunpack.c.l.b16 %v353
    %v1190 = vunpack.c.h.b16 %v353
    %v1191 = vunpack.c.l.b16 %v354
    %v1192 = vunpack.c.h.b16 %v354
    %v1193 = vunpack.c.l.b16 %v355
    %v1194 = vunpack.c.h.b16 %v355
    %v1195 = vunpack.c.l.b16 %v356
    %v1196 = vunpack.c.h.b16 %v356
    %v1197 = vunpack.c.l.b16 %v357
    %v1198 = vunpack.c.h.b16 %v357
    %v1199 = vunpack.c.l.b16 %v358
    %v1200 = vunpack.c.h.b16 %v358
    %v1201 = vunpack.c.l.b16 %v359
    %v1202 = vunpack.c.h.b16 %v359
    %v1203 = vunpack.c.l.b16 %v360
    %v1204 = vunpack.c.h.b16 %v360
    %v1205 = vunpack.c.l.b16 %v361
    %v1206 = vunpack.c.h.b16 %v361
    %v1207 = vunpack.c.l.b16 %v362
    %v1208 = vunpack.c.h.b16 %v362
    %v1209 = vunpack.c.l.b16 %v363
    %v1210 = vunpack.c.h.b16 %v363
    %v1211 = vunpack.c.l.b16 %v364
    %v1212 = vunpack.c.h.b16 %v364
    %v1213 = vunpack.c.l.b16 %v365
    %v1214 = vunpack.c.h.b16 %v365
    %v1215 = vunpack.c.l.b16 %v366
    %v1216 = vunpack.c.h.b16 %v366
    %v1217 = vunpack.c.l.b16 %v367
    %v1218 = vunpack.c.h.b16 %v367
    %v1219 = vunpack.c.l.b16 %v368
    %v1220 = vunpack.c.h.b16 %v368
    %v1221 = vunpack.c.l.b16 %v369
    %v1222 = vunpack.c.h.b16 %v369
    %v1223 = vunpack.c.l.b16 %v370
    %v1224 = vunpack.c.h.b16 %v370
    %v1225 = vunpack.c.l.b16 %v371
    %v1226 = vunpack.c.h.b16 %v371
    %v1227 = vunpack.c.l.b16 %v372
    %v1228 = vunpack.c.h.b16 %v372
    %v1229 = vunpack.c.l.b16 %v373
    %v1230 = vunpack.c.h.b16 %v373
    %v1231 = vunpack.c.l.b16 %v374
    %v1232 = vunpack.c.h.b16 %v374
    %v1233 = vunpack.c.l.b16 %v375
    %v1234 = vunpack.c.h.b16 %v375
    %v1235 = vunpack.c.l.b16 %v376
    %v1236 = vunpack.c.h.b16 %v376
    %v1237 = vunpack.c.l.b16 %v377
    %v1238 = vunpack.c.h.b16 %v377
    %v1239 = vunpack.c.l.b16 %v378
    %v1240 = vunpack.c.h.b16 %v378
    %v1241 = vunpack.c.l.b16 %v379
    %v1242 = vunpack.c.h.b16 %v379
    %v1243 = vunpack.c.l.b16 %v380
    %v1244 = vunpack.c.h.b16 %v380
    %v1245 = vunpack.c.l.b16 %v381
    %v1246 = vunpack.c.h.b16 %v381
    %v1247 = vunpack.c.l.b16 %v382
    %v1248 = vunpack.c.h.b16 %v382
    %v1249 = vunpack.c.l.b16 %v383
    %v1250 = vunpack.c.h.b16 %v383
    %v1251 = vunpack.c.l.b16 %v384
    %v1252 = vunpack.c.h.b16 %v384
    %v1253 = vunpack.c.l.b16 %v385
    %v1254 = vunpack.c.h.b16 %v385
    %v1255 = vunpack.c.l.b16 %v386
    %v1256 = vunpack.c.h.b16 %v386
    %v1257 = vunpack.c.l.b16 %v387
    %v1258 = vunpack.c.h.b16 %v387
    %v1259 = vunpack.c.l.b16 %v388
    %v1260 = vunpack.c.h.b16 %v388
    %v1261 = vunpack.c.l.b16 %v389
    %v1262 = vunpack.c.h.b16 %v389
    %v1263 = vunpack.c.l.b16 %v390
    %v1264 = vunpack.c.h.b16 %v390
    %v1265 = vunpack.c.l.b16 %v391
    %v1266 = vunpack.c.h.b16 %v391
    %v1267 = vunpack.c.l.b16 %v392
    %v1268 = vunpack.c.h.b16 %v392
    %v1269 = vunpack.c.l.b16 %v393
    %v1270 = vunpack.c.h.b16 %v393
    %v1271 = vunpack.c.l.b16 %v394
    %v1272 = vunpack.c.h.b16 %v394
    %v1273 = vunpack.c.l.b16 %v395
    %v1274 = vunpack.c.h.b16 %v395
    %v1275 = vunpack.c.l.b16 %v396
    %v1276 = vunpack.c.h.b16 %v396
    %v1277 = vunpack.c.l.b16 %v397
    %v1278 = vunpack.c.h.b16 %v397
    %v1279 = vunpack.c.l.b16 %v398
    %v1280 = vunpack.c.h.b16 %v398
    %v1281 = vunpack.c.l.b16 %v399
    %v1282 = vunpack.c.h.b16 %v399
    %v1283 = vunpack.c.l.b16 %v400
    %v1284 = vunpack.c.h.b16 %v400
    %v1285 = vunpack.c.l.b16 %v401
    %v1286 = vunpack.c.h.b16 %v401
    %v1287 = vunpack.c.l.b16 %v402
    %v1288 = vunpack.c.h.b16 %v402
    %v1289 = vunpack.c.l.b16 %v403
    %v1290 = vunpack.c.h.b16 %v403
    %v1291 = vunpack.c.l.b16 %v404
    %v1292 = vunpack.c.h.b16 %v404
    %v1293 = vunpack.c.l.b16 %v405
    %v1294 = vunpack.c.h.b16 %v405
    %v1295 = vunpack.c.l.b16 %v406
    %v1296 = vunpack.c.h.b16 %v406
    %v1297 = vunpack.c.l.b16 %v407
    %v1298 = vunpack.c.h.b16 %v407
    %v1299 = vunpack.c.l.b16 %v408
    %v1300 = vunpack.c.h.b16 %v408
    %v1301 = vunpack.c.l.b16 %v409
    %v1302 = vunpack.c.h.b16 %v409
    %v1303 = vunpack.c.l.b16 %v410
    %v1304 = vunpack.c.h.b16 %v410
    %v1305 = vunpack.c.l.b16 %v411
    %v1306 = vunpack.c.h.b16 %v411
    %v1307 = vunpack.c.l.b16 %v412
    %v1308 = vunpack.c.h.b16 %v412
    %v1309 = vunpack.c.l.b16 %v413
    %v1310 = vunpack.c.h.b16 %v413
    %v1311 = vunpack.c.l.b16 %v414
    %v1312 = vunpack.c.h.b16 %v414
    %v1313 = vunpack.c.l.b16 %v415
    %v1314 = vunpack.c.h.b16 %v415
    %v1315 = vunpack.c.l.b16 %v416
    %v1316 = vunpack.c.h.b16 %v416
    %v1317 = vunpack.c.l.b16 %v417
    %v1318 = vunpack.c.h.b16 %v417
    %v1319 = vunpack.c.l.b16 %v418
    %v1320 = vunpack.c.h.b16 %v418
    %v1321 = vunpack.c.l.b16 %v419
    %v1322 = vunpack.c.h.b16 %v419
    %v1323 = vunpack.c.l.b16 %v420
    %v1324 = vunpack.c.h.b16 %v420
    %v1325 = vunpack.c.l.b16 %v421
    %v1326 = vunpack.c.h.b16 %v421
    %v1327 = vunpack.c.l.b16 %v422
    %v1328 = vunpack.c.h.b16 %v422
    %v1329 = vunpack.c.l.b16 %v423
    %v1330 = vunpack.c.h.b16 %v423
    %v1331 = vunpack.c.l.b16 %v424
    %v1332 = vunpack.c.h.b16 %v424
    %v1333 = vunpack.c.l.b16 %v425
    %v1334 = vunpack.c.h.b16 %v425
    %v1335 = vunpack.c.l.b16 %v426
    %v1336 = vunpack.c.h.b16 %v426
    %v1337 = vunpack.c.l.b16 %v427
    %v1338 = vunpack.c.h.b16 %v427
    %v1339 = vunpack.c.l.b16 %v428
    %v1340 = vunpack.c.h.b16 %v428
    %v1341 = vunpack.c.l.b16 %v429
    %v1342 = vunpack.c.h.b16 %v429
    %v1343 = vunpack.c.l.b16 %v430
    %v1344 = vunpack.c.h.b16 %v430
    %v1345 = vunpack.c.l.b16 %v431
    %v1346 = vunpack.c.h.b16 %v431
    %v1347 = vunpack.c.l.b16 %v432
    %v1348 = vunpack.c.h.b16 %v432
    %v1349 = vunpack.c.l.b16 %v433
    %v1350 = vunpack.c.h.b16 %v433
    %v1351 = vunpack.c.l.b16 %v434
    %v1352 = vunpack.c.h.b16 %v434
    %v1353 = vunpack.c.l.b16 %v435
    %v1354 = vunpack.c.h.b16 %v435
    %v1355 = vunpack.c.l.b16 %v436
    %v1356 = vunpack.c.h.b16 %v436
    %v1357 = vunpack.c.l.b16 %v437
    %v1358 = vunpack.c.h.b16 %v437
    %v1359 = vunpack.c.l.b16 %v438
    %v1360 = vunpack.c.h.b16 %v438
    %v1361 = vunpack.c.l.b16 %v439
    %v1362 = vunpack.c.h.b16 %v439
    %v1363 = vunpack.c.l.b16 %v440
    %v1364 = vunpack.c.h.b16 %v440
    %v1365 = vunpack.c.l.b16 %v441
    %v1366 = vunpack.c.h.b16 %v441
    %v1367 = vunpack.c.l.b16 %v442
    %v1368 = vunpack.c.h.b16 %v442
    %v1369 = vunpack.c.l.b16 %v443
    %v1370 = vunpack.c.h.b16 %v443
    %v1371 = vunpack.c.l.b16 %v444
    %v1372 = vunpack.c.h.b16 %v444
    %v1373 = vunpack.c.l.b16 %v445
    %v1374 = vunpack.c.h.b16 %v445
    %v1375 = vunpack.c.l.b16 %v446
    %v1376 = vunpack.c.h.b16 %v446
    %v1377 = vunpack.c.l.b16 %v447
    %v1378 = vunpack.c.h.b16 %v447
    %v1379 = vunpack.c.l.b16 %v448
    %v1380 = vunpack.c.h.b16 %v448
    %v1381 = vunpack.c.l.b16 %v449
    %v1382 = vunpack.c.h.b16 %v449
    %v1383 = vunpack.c.l.b16 %v450
    %v1384 = vunpack.c.h.b16 %v450
    %v1385 = vunpack.c.l.b16 %v451
    %v1386 = vunpack.c.h.b16 %v451
    %v1387 = vunpack.c.l.b16 %v452
    %v1388 = vunpack.c.h.b16 %v452
    %v1389 = vunpack.c.l.b16 %v453
    %v1390 = vunpack.c.h.b16 %v453
    %v1391 = vunpack.c.l.b16 %v454
    %v1392 = vunpack.c.h.b16 %v454
    %v1393 = vunpack.c.l.b16 %v455
    %v1394 = vunpack.c.h.b16 %v455
    %v1395 = vunpack.c.l.b16 %v456
    %v1396 = vunpack.c.h.b16 %v456
    %v1397 = vunpack.c.l.b16 %v457
    %v1398 = vunpack.c.h.b16 %v457
    %v1399 = vunpack.c.l.b16 %v458
    %v1400 = vunpack.c.h.b16 %v458
    %v1401 = vunpack.c.l.b16 %v459
    %v1402 = vunpack.c.h.b16 %v459
    %v1403 = vunpack.c.l.b16 %v460
    %v1404 = vunpack.c.h.b16 %v460
    %v1405 = vunpack.c.l.b16 %v461
    %v1406 = vunpack.c.h.b16 %v461
    %v1407 = vunpack.c.l.b16 %v462
    %v1408 = vunpack.c.h.b16 %v462
    %v1409 = vunpack.c.l.b16 %v463
    %v1410 = vunpack.c.h.b16 %v463
    %v1411 = vunpack.c.l.b16 %v464
    %v1412 = vunpack.c.h.b16 %v464
    %v1413 = vunpack.c.l.b16 %v465
    %v1414 = vunpack.c.h.b16 %v465
    %v1415 = vunpack.c.l.b16 %v466
    %v1416 = vunpack.c.h.b16 %v466
    %v1417 = vunpack.c.l.b16 %v467
    %v1418 = vunpack.c.h.b16 %v467
    %v1419 = vunpack.c.l.b16 %v468
    %v1420 = vunpack.c.h.b16 %v468
    %v1421 = vunpack.c.l.b16 %v469
    %v1422 = vunpack.c.h.b16 %v469
    %v1423 = vunpack.c.l.b16 %v470
    %v1424 = vunpack.c.h.b16 %v470
    %v1425 = vunpack.c.l.b16 %v471
    %v1426 = vunpack.c.h.b16 %v471
    %v1427 = vunpack.c.l.b16 %v472
    %v1428 = vunpack.c.h.b16 %v472
    %v1429 = vunpack.c.l.b16 %v473
    %v1430 = vunpack.c.h.b16 %v473
    %v1431 = vunpack.c.l.b16 %v474
    %v1432 = vunpack.c.h.b16 %v474
    %v1433 = vunpack.c.l.b16 %v475
    %v1434 = vunpack.c.h.b16 %v475
    %v1435 = vunpack.c.l.b16 %v476
    %v1436 = vunpack.c.h.b16 %v476
    %v1437 = vunpack.c.l.b16 %v477
    %v1438 = vunpack.c.h.b16 %v477
    %v1439 = vunpack.c.l.b16 %v478
    %v1440 = vunpack.c.h.b16 %v478
    %v1441 = vunpack.c.l.b16 %v479
    %v1442 = vunpack.c.h.b16 %v479
    %v1443 = vunpack.c.l.b16 %v480
    %v1444 = vunpack.c.h.b16 %v480
    %v1445 = vunpack.c.l.b16 %v481
    %v1446 = vunpack.c.h.b16 %v481
    %v1447 = vunpack.c.l.b16 %v482
    %v1448 = vunpack.c.h.b16 %v482
    %v1449 = vunpack.c.l.b16 %v483
    %v1450 = vunpack.c.h.b16 %v483
    %v1451 = vunpack.c.l.b16 %v484
    %v1452 = vunpack.c.h.b16 %v484
    %v1453 = vunpack.c.l.b16 %v485
    %v1454 = vunpack.c.h.b16 %v485
    %v1455 = vunpack.c.l.b16 %v486
    %v1456 = vunpack.c.h.b16 %v486
    %v1457 = vunpack.c.l.b16 %v487
    %v1458 = vunpack.c.h.b16 %v487
    %v1459 = vunpack.c.l.b16 %v488
    %v1460 = vunpack.c.h.b16 %v488
    %v1461 = vunpack.c.l.b16 %v489
    %v1462 = vunpack.c.h.b16 %v489
    %v1463 = vunpack.c.l.b16 %v490
    %v1464 = vunpack.c.h.b16 %v490
    %v1465 = vunpack.c.l.b16 %v491
    %v1466 = vunpack.c.h.b16 %v491
    %v1467 = vunpack.c.l.b16 %v492
    %v1468 = vunpack.c.h.b16 %v492
    %v1469 = vunpack.c.l.b16 %v493
    %v1470 = vunpack.c.h.b16 %v493
    %v1471 = vunpack.c.l.b16 %v494
    %v1472 = vunpack.c.h.b16 %v494
    %v1473 = vunpack.c.l.b16 %v495
    %v1474 = vunpack.c.h.b16 %v495
    %v1475 = vunpack.c.l.b16 %v496
    %v1476 = vunpack.c.h.b16 %v496
    %v1477 = vunpack.c.l.b16 %v497
    %v1478 = vunpack.c.h.b16 %v497
    %v1479 = vunpack.c.l.b16 %v498
    %v1480 = vunpack.c.h.b16 %v498
    %v1481 = vunpack.c.l.b16 %v499
    %v1482 = vunpack.c.h.b16 %v499
    %v1483 = vunpack.c.l.b16 %v500
    %v1484 = vunpack.c.h.b16 %v500
    %v1485 = vunpack.c.l.b16 %v501
    %v1486 = vunpack.c.h.b16 %v501
    %v1487 = vunpack.c.l.b16 %v502
    %v1488 = vunpack.c.h.b16 %v502
    %v1489 = vunpack.c.l.b16 %v503
    %v1490 = vunpack.c.h.b16 %v503
    %v1491 = vunpack.c.l.b16 %v504
    %v1492 = vunpack.c.h.b16 %v504
    %v1493 = vunpack.c.l.b16 %v505
    %v1494 = vunpack.c.h.b16 %v505
    %v1495 = vunpack.c.l.b16 %v506
    %v1496 = vunpack.c.h.b16 %v506
    %v1497 = vunpack.c.l.b16 %v507
    %v1498 = vunpack.c.h.b16 %v507
    %v1499 = vunpack.c.l.b16 %v508
    %v1500 = vunpack.c.h.b16 %v508
    %v1501 = vunpack.c.l.b16 %v509
    %v1502 = vunpack.c.h.b16 %v509
    %v1503 = vunpack.c.l.b16 %v510
    %v1504 = vunpack.c.h.b16 %v510
    %v1505 = vunpack.c.l.b16 %v511
    %v1506 = vunpack.c.h.b16 %v511
    %v1507 = vunpack.c.l.b16 %v512
    %v1508 = vunpack.c.h.b16 %v512
    %v1509 = vunpack.c.l.b16 %v513
    %v1510 = vunpack.c.h.b16 %v513
    %v1511 = vunpack.c.l.b16 %v514
    %v1512 = vunpack.c.h.b16 %v514
    %v1513 = vunpack.c.l.b16 %v515
    %v1514 = vunpack.c.h.b16 %v515
    %v1515 = vunpack.c.l.b16 %v516
    %v1516 = vunpack.c.h.b16 %v516
    %v1517 = vunpack.c.l.b16 %v517
    %v1518 = vunpack.c.h.b16 %v517
    %v1519 = vunpack.c.l.b16 %v518
    %v1520 = vunpack.c.h.b16 %v518
    %v1521 = vunpack.c.l.b16 %v519
    %v1522 = vunpack.c.h.b16 %v519
    %v1523 = vunpack.c.l.b16 %v520
    %v1524 = vunpack.c.h.b16 %v520
    %v1525 = vunpack.c.l.b16 %v521
    %v1526 = vunpack.c.h.b16 %v521
    %v1527 = vunpack.c.l.b16 %v522
    %v1528 = vunpack.c.h.b16 %v522
    %v1529 = vunpack.c.l.b16 %v523
    %v1530 = vunpack.c.h.b16 %v523
    %v1531 = vunpack.c.l.b16 %v524
    %v1532 = vunpack.c.h.b16 %v524
    %v1533 = vunpack.c.l.b16 %v525
    %v1534 = vunpack.c.h.b16 %v525
    %v1535 = vunpack.c.l.b16 %v526
    %v1536 = vunpack.c.h.b16 %v526
    %v1537 = vunpack.c.l.b16 %v527
    %v1538 = vunpack.c.h.b16 %v527
    %v1539 = vunpack.c.l.b16 %v528
    %v1540 = vunpack.c.h.b16 %v528
    %v1541 = vunpack.c.l.b16 %v529
    %v1542 = vunpack.c.h.b16 %v529
    %v1543 = vunpack.c.l.b16 %v530
    %v1544 = vunpack.c.h.b16 %v530
    %v1545 = vunpack.c.l.b16 %v531
    %v1546 = vunpack.c.h.b16 %v531
    %v1547 = vunpack.c.l.b16 %v532
    %v1548 = vunpack.c.h.b16 %v532
    %v1549 = vunpack.c.l.b16 %v533
    %v1550 = vunpack.c.h.b16 %v533
    %v1551 = vunpack.c.l.b16 %v534
    %v1552 = vunpack.c.h.b16 %v534
    %v1553 = vunpack.c.l.b16 %v535
    %v1554 = vunpack.c.h.b16 %v535
    %v1555 = vunpack.c.l.b16 %v536
    %v1556 = vunpack.c.h.b16 %v536
    %v1557 = vunpack.c.l.b16 %v537
    %v1558 = vunpack.c.h.b16 %v537
    %v1559 = vpack.c.b16 %v973, %v971
    %v1560 = vpack.c.b16 %v974, %v972
    %v1561 = vpack.c.b16 %v977, %v975
    %v1562 = vpack.c.b16 %v978, %v976
    %v1563 = vpack.c.b16 %v981, %v979
    %v1564 = vpack.c.b16 %v982, %v980
    %v1565 = vpack.c.b16 %v985, %v983
    %v1566 = vpack.c.b16 %v986, %v984
    %v1567 = vpack.c.b16 %v989, %v987
    %v1568 = vpack.c.b16 %v990, %v988
    %v1569 = vpack.c.b16 %v993, %v991
    %v1570 = vpack.c.b16 %v994, %v992
    %v1571 = vpack.c.b16 %v997, %v995
    %v1572 = vpack.c.b16 %v998, %v996
    %v1573 = vpack.c.b16 %v1001, %v999
    %v1574 = vpack.c.b16 %v1002, %v1000
    %v1575 = vpack.c.b16 %v1005, %v1003
    %v1576 = vpack.c.b16 %v1006, %v1004
    %v1577 = vpack.c.b16 %v1009, %v1007
    %v1578 = vpack.c.b16 %v1010, %v1008
    %v1579 = vpack.c.b16 %v1013, %v1011
    %v1580 = vpack.c.b16 %v1014, %v1012
    %v1581 = vpack.c.b16 %v1017, %v1015
    %v1582 = vpack.c.b16 %v1018, %v1016
    %v1583 = vpack.c.b16 %v1021, %v1019
    %v1584 = vpack.c.b16 %v1022, %v1020
    %v1585 = vpack.c.b16 %v1025, %v1023
    %v1586 = vpack.c.b16 %v1026, %v1024
    %v1587 = vpack.c.b16 %v1029, %v1027
    %v1588 = vpack.c.b16 %v1030, %v1028
    %v1589 = vpack.c.b16 %v1033, %v1031
    %v1590 = vpack.c.b16 %v1034, %v1032
    %v1591 = vpack.c.b16 %v1037, %v1035
    %v1592 = vpack.c.b16 %v1038, %v1036
    %v1593 = vpack.c.b16 %v1041, %v1039
    %v1594 = vpack.c.b16 %v1042, %v1040
    %v1595 = vpack.c.b16 %v1045, %v1043
    %v1596 = vpack.c.b16 %v1046, %v1044
    %v1597 = vpack.c.b16 %v1049, %v1047
    %v1598 = vpack.c.b16 %v1050, %v1048
    %v1599 = vpack.c.b16 %v1053, %v1051
    %v1600 = vpack.c.b16 %v1054, %v1052
    %v1601 = vpack.c.b16 %v1057, %v1055
    %v1602 = vpack.c.b16 %v1058, %v1056
    %v1603 = vpack.c.b16 %v1061, %v1059
    %v1604 = vpack.c.b16 %v1062, %v1060
    %v1605 = vpack.c.b16 %v1065, %v1063
    %v1606 = vpack.c.b16 %v1066, %v1064
    %v1607 = vpack.c.b16 %v1069, %v1067
    %v1608 = vpack.c.b16 %v1070, %v1068
    %v1609 = vpack.c.b16 %v1073, %v1071
    %v1610 = vpack.c.b16 %v1074, %v1072
    %v1611 = vpack.c.b16 %v1077, %v1075
    %v1612 = vpack.c.b16 %v1078, %v1076
    %v1613 = vpack.c.b16 %v1081, %v1079
    %v1614 = vpack.c.b16 %v1082, %v1080
    %v1615 = vpack.c.b16 %v1085, %v1083
    %v1616 = vpack.c.b16 %v1086, %v1084
    %v1617 = vpack.c.b16 %v1089, %v1087
    %v1618 = vpack.c.b16 %v1090, %v1088
    %v1619 = vpack.c.b16 %v1093, %v1091
    %v1620 = vpack.c.b16 %v1094, %v1092
    %v1621 = vpack.c.b16 %v1097, %v1095
    %v1622 = vpack.c.b16 %v1098, %v1096
    %v1623 = vpack.c.b16 %v1101, %v1099
    %v1624 = vpack.c.b16 %v1102, %v1100
    %v1625 = vpack.c.b16 %v1105, %v1103
    %v1626 = vpack.c.b16 %v1106, %v1104
    %v1627 = vpack.c.b16 %v1109, %v1107
    %v1628 = vpack.c.b16 %v1110, %v1108
    %v1629 = vpack.c.b16 %v1113, %v1111
    %v1630 = vpack.c.b16 %v1114, %v1112
    %v1631 = vpack.c.b16 %v1117, %v1115
    %v1632 = vpack.c.b16 %v1118, %v1116
    %v1633 = vpack.c.b16 %v1121, %v1119
    %v1634 = vpack.c.b16 %v1122, %v1120
    %v1635 = vpack.c.b16 %v1125, %v1123
    %v1636 = vpack.c.b16 %v1126, %v1124
    %v1637 = vpack.c.b16 %v1129, %v1127
    %v1638 = vpack.c.b16 %v1130, %v1128
    %v1639 = vpack.c.b16 %v1133, %v1131
    %v1640 = vpack.c.b16 %v1134, %v1132
    %v1641 = vpack.c.b16 %v1137, %v1135
    %v1642 = vpack.c.b16 %v1138, %v1136
    %v1643 = vpack.c.b16 %v1141, %v1139
    %v1644 = vpack.c.b16 %v1142, %v1140
    %v1645 = vpack.c.b16 %v1145, %v1143
    %v1646 = vpack.c.b16 %v1146, %v1144
    %v1647 = vpack.c.b16 %v1149, %v1147
    %v1648 = vpack.c.b16 %v1150, %v1148
    %v1649 = vpack.c.b16 %v1153, %v1151
    %v1650 = vpack.c.b16 %v1154, %v1152
    %v1651 = vpack.c.b16 %v1157, %v1155
    %v1652 = vpack.c.b16 %v1158, %v1156
    %v1653 = vpack.c.b16 %v1161, %v1159
    %v1654 = vpack.c.b16 %v1162, %v1160
    %v1655 = vpack.c.b16 %v1165, %v1163
    %v1656 = vpack.c.b16 %v1166, %v1164
    %v1657 = vpack.c.b16 %v1169, %v1167
    %v1658 = vpack.c.b16 %v1170, %v1168
    %v1659 = vpack.c.b16 %v1173, %v1171
    %v1660 = vpack.c.b16 %v1174, %v1172
    %v1661 = vpack.c.b16 %v1177, %v1175
    %v1662 = vpack.c.b16 %v1178, %v1176
    %v1663 = vpack.c.b16 %v1181, %v1179
    %v1664 = vpack.c.b16 %v1182, %v1180
    %v1665 = vpack.c.b16 %v1185, %v1183
    %v1666 = vpack.c.b16 %v1186, %v1184
    %v1667 = vpack.c.b16 %v1189, %v1187
    %v1668 = vpack.c.b16 %v1190, %v1188
    %v1669 = vpack.c.b16 %v1193, %v1191
    %v1670 = vpack.c.b16 %v1194, %v1192
    %v1671 = vpack.c.b16 %v1197, %v1195
    %v1672 = vpack.c.b16 %v1198, %v1196
    %v1673 = vpack.c.b16 %v1201, %v1199
    %v1674 = vpack.c.b16 %v1202, %v1200
    %v1675 = vpack.c.b16 %v1205, %v1203
    %v1676 = vpack.c.b16 %v1206, %v1204
    %v1677 = vpack.c.b16 %v1209, %v1207
    %v1678 = vpack.c.b16 %v1210, %v1208
    %v1679 = vpack.c.b16 %v1213, %v1211
    %v1680 = vpack.c.b16 %v1214, %v1212
    %v1681 = vpack.c.b16 %v1217, %v1215
    %v1682 = vpack.c.b16 %v1218, %v1216
    %v1683 = vpack.c.b16 %v1221, %v1219
    %v1684 = vpack.c.b16 %v1222, %v1220
    %v1685 = vpack.c.b16 %v1225, %v1223
    %v1686 = vpack.c.b16 %v1226, %v1224
    %v1687 = vpack.c.b16 %v1229, %v1227
    %v1688 = vpack.c.b16 %v1230, %v1228
    %v1689 = vpack.c.b16 %v1233, %v1231
    %v1690 = vpack.c.b16 %v1234, %v1232
    %v1691 = vpack.c.b16 %v1237, %v1235
    %v1692 = vpack.c.b16 %v1238, %v1236
    %v1693 = vpack.c.b16 %v1241, %v1239
    %v1694 = vpack.c.b16 %v1242, %v1240
    %v1695 = vpack.c.b16 %v1245, %v1243
    %v1696 = vpack.c.b16 %v1246, %v1244
    %v1697 = vpack.c.b16 %v1249, %v1247
    %v1698 = vpack.c.b16 %v1250, %v1248
    %v1699 = vpack.c.b16 %v1253, %v1251
    %v1700 = vpack.c.b16 %v1254, %v1252
    %v1701 = vpack.c.b16 %v1257, %v1255
    %v1702 = vpack.c.b16 %v1258, %v1256
    %v1703 = vpack.c.b16 %v1261, %v1259
    %v1704 = vpack.c.b16 %v1262, %v1260
    %v1705 = vpack.c.b16 %v1265, %v1263
    %v1706 = vpack.c.b16 %v1266, %v1264
    %v1707 = vpack.c.b16 %v1269, %v1267
    %v1708 = vpack.c.b16 %v1270, %v1268
    %v1709 = vpack.c.b16 %v1273, %v1271
    %v1710 = vpack.c.b16 %v1274, %v1272
    %v1711 = vpack.c.b16 %v1277, %v1275
    %v1712 = vpack.c.b16 %v1278, %v1276
    %v1713 = vpack.c.b16 %v1281, %v1279
    %v1714 = vpack.c.b16 %v1282, %v1280
    %v1715 = vpack.c.b16 %v1285, %v1283
    %v1716 = vpack.c.b16 %v1286, %v1284
    %v1717 = vpack.c.b16 %v1289, %v1287
    %v1718 = vpack.c.b16 %v1290, %v1288
    %v1719 = vpack.c.b16 %v1293, %v1291
    %v1720 = vpack.c.b16 %v1294, %v1292
    %v1721 = vpack.c.b16 %v1297, %v1295
    %v1722 = vpack.c.b16 %v1298, %v1296
    %v1723 = vpack.c.b16 %v1301, %v1299
    %v1724 = vpack.c.b16 %v1302, %v1300
    %v1725 = vpack.c.b16 %v1305, %v1303
    %v1726 = vpack.c.b16 %v1306, %v1304
    %v1727 = vpack.c.b16 %v1309, %v1307
    %v1728 = vpack.c.b16 %v1310, %v1308
    %v1729 = vpack.c.b16 %v1313, %v1311
    %v1730 = vpack.c.b16 %v1314, %v1312
    %v1731 = vpack.c.b16 %v1317, %v1315
    %v1732 = vpack.c.b16 %v1318, %v1316
    %v1733 = vpack.c.b16 %v1321, %v1319
    %v1734 = vpack.c.b16 %v1322, %v1320
    %v1735 = vpack.c.b16 %v1325, %v1323
    %v1736 = vpack.c.b16 %v1326, %v1324
    %v1737 = vpack.c.b16 %v1329, %v1327
    %v1738 = vpack.c.b16 %v1330, %v1328
    %v1739 = vpack.c.b16 %v1333, %v1331
    %v1740 = vpack.c.b16 %v1334, %v1332
    %v1741 = vpack.c.b16 %v1337, %v1335
    %v1742 = vpack.c.b16 %v1338, %v1336
    %v1743 = vpack.c.b16 %v1341, %v1339
    %v1744 = vpack.c.b16 %v1342, %v1340
    %v1745 = vpack.c.b16 %v1345, %v1343
    %v1746 = vpack.c.b16 %v1346, %v1344
    %v1747 = vpack.c.b16 %v1349, %v1347
    %v1748 = vpack.c.b16 %v1350, %v1348
    %v1749 = vpack.c.b16 %v1353, %v1351
    %v1750 = vpack.c.b16 %v1354, %v1352
    %v1751 = vpack.c.b16 %v1357, %v1355
    %v1752 = vpack.c.b16 %v1358, %v1356
    %v1753 = vpack.c.b16 %v1361, %v1359
    %v1754 = vpack.c.b16 %v1362, %v1360
    %v1755 = vpack.c.b16 %v1365, %v1363
    %v1756 = vpack.c.b16 %v1366, %v1364
    %v1757 = vpack.c.b16 %v1369, %v1367
    %v1758 = vpack.c.b16 %v1370, %v1368
    %v1759 = vpack.c.b16 %v1373, %v1371
    %v1760 = vpack.c.b16 %v1374, %v1372
    %v1761 = vpack.c.b16 %v1377, %v1375
    %v1762 = vpack.c.b16 %v1378, %v1376
    %v1763 = vpack.c.b16 %v1381, %v1379
    %v1764 = vpack.c.b16 %v1382, %v1380
    %v1765 = vpack.c.b16 %v1385, %v1383
    %v1766 = vpack.c.b16 %v1386, %v1384
    %v1767 = vpack.c.b16 %v1389, %v1387
    %v1768 = vpack.c.b16 %v1390, %v1388
    %v1769 = vpack.c.b16 %v1393, %v1391
    %v1770 = vpack.c.b16 %v1394, %v1392
    %v1771 = vpack.c.b16 %v1397, %v1395
    %v1772 = vpack.c.b16 %v1398, %v1396
    %v1773 = vpack.c.b16 %v1401, %v1399
    %v1774 = vpack.c.b16 %v1402, %v1400
    %v1775 = vpack.c.b16 %v1405, %v1403
    %v1776 = vpack.c.b16 %v1406, %v1404
    %v1777 = vpack.c.b16 %v1409, %v1407
    %v1778 = vpack.c.b16 %v1410, %v1408
    %v1779 = vpack.c.b16 %v1413, %v1411
    %v1780 = vpack.c.b16 %v1414, %v1412
    %v1781 = vpack.c.b16 %v1417, %v1415
    %v1782 = vpack.c.b16 %v1418, %v1416
    %v1783 = vpack.c.b16 %v1421, %v1419
    %v1784 = vpack.c.b16 %v1422, %v1420
    %v1785 = vpack.c.b16 %v1425, %v1423
    %v1786 = vpack.c.b16 %v1426, %v1424
    %v1787 = vpack.c.b16 %v1429, %v1427
    %v1788 = vpack.c.b16 %v1430, %v1428
    %v1789 = vpack.c.b16 %v1433, %v1431
    %v1790 = vpack.c.b16 %v1434, %v1432
    %v1791 = vpack.c.b16 %v1437, %v1435
    %v1792 = vpack.c.b16 %v1438, %v1436
    %v1793 = vpack.c.b16 %v1441, %v1439
    %v1794 = vpack.c.b16 %v1442, %v1440
    %v1795 = vpack.c.b16 %v1445, %v1443
    %v1796 = vpack.c.b16 %v1446, %v1444
    %v1797 = vpack.c.b16 %v1449, %v1447
    %v1798 = vpack.c.b16 %v1450, %v1448
    %v1799 = vpack.c.b16 %v1453, %v1451
    %v1800 = vpack.c.b16 %v1454, %v1452
    %v1801 = vpack.c.b16 %v1457, %v1455
    %v1802 = vpack.c.b16 %v1458, %v1456
    %v1803 = vpack.c.b16 %v1461, %v1459
    %v1804 = vpack.c.b16 %v1462, %v1460
    %v1805 = vpack.c.b16 %v1465, %v1463
    %v1806 = vpack.c.b16 %v1466, %v1464
    %v1807 = vpack.c.b16 %v1469, %v1467
    %v1808 = vpack.c.b16 %v1470, %v1468
    %v1809 = vpack.c.b16 %v1473, %v1471
    %v1810 = vpack.c.b16 %v1474, %v1472
    %v1811 = vpack.c.b16 %v1477, %v1475
    %v1812 = vpack.c.b16 %v1478, %v1476
    %v1813 = vpack.c.b16 %v1481, %v1479
    %v1814 = vpack.c.b16 %v1482, %v1480
    %v1815 = vpack.c.b16 %v1485, %v1483
    %v1816 = vpack.c.b16 %v1486, %v1484
    %v1817 = vpack.c.b16 %v1489, %v1487
    %v1818 = vpack.c.b16 %v1490, %v1488
    %v1819 = vpack.c.b16 %v1493, %v1491
    %v1820 = vpack.c.b16 %v1494, %v1492
    %v1821 = vpack.c.b16 %v1497, %v1495
    %v1822 = vpack.c.b16 %v1498, %v1496
    %v1823 = vpack.c.b16 %v1501, %v1499
    %v1824 = vpack.c.b16 %v1502, %v1500
    %v1825 = vpack.c.b16 %v1505, %v1503
    %v1826 = vpack.c.b16 %v1506, %v1504
    %v1827 = vpack.c.b16 %v1509, %v1507
    %v1828 = vpack.c.b16 %v1510, %v1508
    %v1829 = vpack.c.b16 %v1513, %v1511
    %v1830 = vpack.c.b16 %v1514, %v1512
    %v1831 = vpack.c.b16 %v1517, %v1515
    %v1832 = vpack.c.b16 %v1518, %v1516
    %v1833 = vpack.c.b16 %v1521, %v1519
    %v1834 = vpack.c.b16 %v1522, %v1520
    %v1835 = vpack.c.b16 %v1525, %v1523
    %v1836 = vpack.c.b16 %v1526, %v1524
    %v1837 = vpack.c.b16 %v1529, %v1527
    %v1838 = vpack.c.b16 %v1530, %v1528
    %v1839 = vpack.c.b16 %v1533, %v1531
    %v1840 = vpack.c.b16 %v1534, %v1532
    %v1841 = vpack.c.b16 %v1537, %v1535
    %v1842 = vpack.c.b16 %v1538, %v1536
    %v1843 = vpack.c.b16 %v1541, %v1539
    %v1844 = vpack.c.b16 %v1542, %v1540
    %v1845 = vpack.c.b16 %v1545, %v1543
    %v1846 = vpack.c.b16 %v1546, %v1544
    %v1847 = vpack.c.b16 %v1549, %v1547
    %v1848 = vpack.c.b16 %v1550, %v1548
    %v1849 = vpack.c.b16 %v1553, %v1551
    %v1850 = vpack.c.b16 %v1554, %v1552
    %v1851 = vpack.c.b16 %v1557, %v1555
    %v1852 = vpack.c.b16 %v1558, %v1556
    %vm2147 = vcmask 392192
    %v2149 = vsel %vm2147, %v240, 0
    %2151 = vmatprep.subr.bf16.mxu0 %v1560
    %2152 = vmatpush1.bf16.msra.mxu0 %v1559
    %2153 = vmatprep.subr.bf16.mxu0 %v1562
    %2154 = vmatpush1.bf16.msra.mxu0 %v1561
    %2155 = vmatprep.subr.bf16.mxu0 %v1564
    %2156 = vmatpush1.bf16.msra.mxu0 %v1563
    %2157 = vmatprep.subr.bf16.mxu0 %v1566
    %2158 = vmatpush1.bf16.msra.mxu0 %v1565
    %2159 = vmatprep.subr.bf16.mxu0 %v1568
    %2160 = vmatpush1.bf16.msra.mxu0 %v1567
    %2161 = vmatprep.subr.bf16.mxu0 %v1570
    %2162 = vmatpush1.bf16.msra.mxu0 %v1569
    %2163 = vmatprep.subr.bf16.mxu0 %v1572
    %2164 = vmatpush1.bf16.msra.mxu0 %v1571
    %2165 = vmatprep.subr.bf16.mxu0 %v1574
    %2166 = vmatpush1.bf16.msra.mxu0 %v1573
    %2167 = vmatprep.subr.bf16.mxu0 %v1576
    %2168 = vmatpush1.bf16.msra.mxu0 %v1575
    %2169 = vmatprep.subr.bf16.mxu0 %v1578
    %2170 = vmatpush1.bf16.msra.mxu0 %v1577
    %2171 = vmatprep.subr.bf16.mxu0 %v1580
    %2172 = vmatpush1.bf16.msra.mxu0 %v1579
    %2173 = vmatprep.subr.bf16.mxu0 %v1582
    %2174 = vmatpush1.bf16.msra.mxu0 %v1581
    %2175 = vmatprep.subr.bf16.mxu0 %v1584
    %2176 = vmatpush1.bf16.msra.mxu0 %v1583
    %2177 = vmatprep.subr.bf16.mxu0 %v1586
    %2178 = vmatpush1.bf16.msra.mxu0 %v1585
    %2179 = vmatprep.subr.bf16.mxu0 %v1588
    %2180 = vmatpush1.bf16.msra.mxu0 %v1587
    %2181 = vmatprep.subr.bf16.mxu0 %v1590
    %2182 = vmatpush1.bf16.msra.mxu0 %v1589
    %2183 = vmatprep.mubr.bf16.mxu0 %v223
    %2184 = vmatmul.mubr.bf16.gmra.mrb[0].mxu0 %v222
    %v2185 = vpop.f32.mrb[0].mxu0
    %v2186 = vadd.f32 %v669, %v2185
    %v2187 = vpop.f32.mrb[0].mxu0
    %v2188 = vadd.f32 %v671, %v2187
    %v2189 = vpop.f32.mrb[0].mxu0
    %v2190 = vadd.f32 %v673, %v2189
    %v2191 = vpop.f32.mrb[0].mxu0
    %v2192 = vadd.f32 %v675, %v2191
    %2193 = vdwg.mxu0
    %2194 = vmatprep.subr.bf16.mxu0 %v1592
    %2195 = vmatpush1.bf16.msra.mxu0 %v1591
    %2196 = vmatprep.subr.bf16.mxu0 %v1594
    %2197 = vmatpush1.bf16.msra.mxu0 %v1593
    %2198 = vmatprep.subr.bf16.mxu0 %v1596
    %2199 = vmatpush1.bf16.msra.mxu0 %v1595
    %2200 = vmatprep.subr.bf16.mxu0 %v1598
    %2201 = vmatpush1.bf16.msra.mxu0 %v1597
    %2202 = vmatprep.subr.bf16.mxu0 %v1600
    %2203 = vmatpush1.bf16.msra.mxu0 %v1599
    %2204 = vmatprep.subr.bf16.mxu0 %v1602
    %2205 = vmatpush1.bf16.msra.mxu0 %v1601
    %2206 = vmatprep.subr.bf16.mxu0 %v1604
    %2207 = vmatpush1.bf16.msra.mxu0 %v1603
    %2208 = vmatprep.subr.bf16.mxu0 %v1606
    %2209 = vmatpush1.bf16.msra.mxu0 %v1605
    %2210 = vmatprep.subr.bf16.mxu0 %v1608
    %2211 = vmatpush1.bf16.msra.mxu0 %v1607
    %2212 = vmatprep.subr.bf16.mxu0 %v1610
    %2213 = vmatpush1.bf16.msra.mxu0 %v1609
    %2214 = vmatprep.subr.bf16.mxu0 %v1612
    %2215 = vmatpush1.bf16.msra.mxu0 %v1611
    %2216 = vmatprep.subr.bf16.mxu0 %v1614
    %2217 = vmatpush1.bf16.msra.mxu0 %v1613
    %2218 = vmatprep.subr.bf16.mxu0 %v1616
    %2219 = vmatpush1.bf16.msra.mxu0 %v1615
    %2220 = vmatprep.subr.bf16.mxu0 %v1618
    %2221 = vmatpush1.bf16.msra.mxu0 %v1617
    %2222 = vmatprep.subr.bf16.mxu0 %v1620
    %2223 = vmatpush1.bf16.msra.mxu0 %v1619
    %2224 = vmatprep.subr.bf16.mxu0 %v1622
    %2225 = vmatpush1.bf16.msra.mxu0 %v1621
    %2226 = vmatprep.mubr.bf16.mxu0 %v225
    %2227 = vmatmul.mubr.bf16.gmra.mrb[0].mxu0 %v224
    %v2228 = vpop.f32.mrb[0].mxu0
    %v2229 = vadd.f32 %v2186, %v2228
    %v2230 = vpop.f32.mrb[0].mxu0
    %v2231 = vadd.f32 %v2188, %v2230
    %v2232 = vpop.f32.mrb[0].mxu0
    %v2233 = vadd.f32 %v2190, %v2232
    %v2234 = vpop.f32.mrb[0].mxu0
    %v2235 = vadd.f32 %v2192, %v2234
    %2236 = vdwg.mxu0
    %2237 = vmatprep.subr.bf16.mxu0 %v1624
    %2238 = vmatpush1.bf16.msra.mxu0 %v1623
    %2239 = vmatprep.subr.bf16.mxu0 %v1626
    %2240 = vmatpush1.bf16.msra.mxu0 %v1625
    %2241 = vmatprep.subr.bf16.mxu0 %v1628
    %2242 = vmatpush1.bf16.msra.mxu0 %v1627
    %2243 = vmatprep.subr.bf16.mxu0 %v1630
    %2244 = vmatpush1.bf16.msra.mxu0 %v1629
    %2245 = vmatprep.subr.bf16.mxu0 %v1632
    %2246 = vmatpush1.bf16.msra.mxu0 %v1631
    %2247 = vmatprep.subr.bf16.mxu0 %v1634
    %2248 = vmatpush1.bf16.msra.mxu0 %v1633
    %2249 = vmatprep.subr.bf16.mxu0 %v1636
    %2250 = vmatpush1.bf16.msra.mxu0 %v1635
    %2251 = vmatprep.subr.bf16.mxu0 %v1638
    %2252 = vmatpush1.bf16.msra.mxu0 %v1637
    %2253 = vmatprep.subr.bf16.mxu0 %v1640
    %2254 = vmatpush1.bf16.msra.mxu0 %v1639
    %2255 = vmatprep.subr.bf16.mxu0 %v1642
    %2256 = vmatpush1.bf16.msra.mxu0 %v1641
    %2257 = vmatprep.subr.bf16.mxu0 %v1644
    %2258 = vmatpush1.bf16.msra.mxu0 %v1643
    %2259 = vmatprep.subr.bf16.mxu0 %v1646
    %2260 = vmatpush1.bf16.msra.mxu0 %v1645
    %2261 = vmatprep.subr.bf16.mxu0 %v1648
    %2262 = vmatpush1.bf16.msra.mxu0 %v1647
    %2263 = vmatprep.subr.bf16.mxu0 %v1650
    %2264 = vmatpush1.bf16.msra.mxu0 %v1649
    %2265 = vmatprep.subr.bf16.mxu0 %v1652
    %2266 = vmatpush1.bf16.msra.mxu0 %v1651
    %2267 = vmatprep.subr.bf16.mxu0 %v1654
    %2268 = vmatpush1.bf16.msra.mxu0 %v1653
    %2269 = vmatprep.mubr.bf16.mxu0 %v227
    %2270 = vmatmul.mubr.bf16.gmra.mrb[0].mxu0 %v226
    %v2271 = vpop.f32.mrb[0].mxu0
    %v2272 = vadd.f32 %v2229, %v2271
    %v2273 = vpop.f32.mrb[0].mxu0
    %v2274 = vadd.f32 %v2231, %v2273
    %v2275 = vpop.f32.mrb[0].mxu0
    %v2276 = vadd.f32 %v2233, %v2275
    %v2277 = vpop.f32.mrb[0].mxu0
    %v2278 = vadd.f32 %v2235, %v2277
    %2279 = vdwg.mxu0
    %2280 = vmatprep.subr.bf16.mxu0 %v1656
    %2281 = vmatpush1.bf16.msra.mxu0 %v1655
    %2282 = vmatprep.subr.bf16.mxu0 %v1658
    %2283 = vmatpush1.bf16.msra.mxu0 %v1657
    %2284 = vmatprep.subr.bf16.mxu0 %v1660
    %2285 = vmatpush1.bf16.msra.mxu0 %v1659
    %2286 = vmatprep.subr.bf16.mxu0 %v1662
    %2287 = vmatpush1.bf16.msra.mxu0 %v1661
    %2288 = vmatprep.subr.bf16.mxu0 %v1664
    %2289 = vmatpush1.bf16.msra.mxu0 %v1663
    %2290 = vmatprep.subr.bf16.mxu0 %v1666
    %2291 = vmatpush1.bf16.msra.mxu0 %v1665
    %2292 = vmatprep.subr.bf16.mxu0 %v1668
    %2293 = vmatpush1.bf16.msra.mxu0 %v1667
    %2294 = vmatprep.subr.bf16.mxu0 %v1670
    %2295 = vmatpush1.bf16.msra.mxu0 %v1669
    %2296 = vmatprep.subr.bf16.mxu0 %v1672
    %2297 = vmatpush1.bf16.msra.mxu0 %v1671
    %2298 = vmatprep.subr.bf16.mxu0 %v1674
    %2299 = vmatpush1.bf16.msra.mxu0 %v1673
    %2300 = vmatprep.subr.bf16.mxu0 %v1676
    %2301 = vmatpush1.bf16.msra.mxu0 %v1675
    %2302 = vmatprep.subr.bf16.mxu0 %v1678
    %2303 = vmatpush1.bf16.msra.mxu0 %v1677
    %2304 = vmatprep.subr.bf16.mxu0 %v1680
    %2305 = vmatpush1.bf16.msra.mxu0 %v1679
    %2306 = vmatprep.subr.bf16.mxu0 %v1682
    %2307 = vmatpush1.bf16.msra.mxu0 %v1681
    %2308 = vmatprep.subr.bf16.mxu0 %v1684
    %2309 = vmatpush1.bf16.msra.mxu0 %v1683
    %2310 = vmatprep.subr.bf16.mxu0 %v1686
    %2311 = vmatpush1.bf16.msra.mxu0 %v1685
    %2312 = vmatprep.mubr.bf16.mxu0 %v229
    %2313 = vmatmul.mubr.bf16.gmra.mrb[0].mxu0 %v228
    %v2314 = vpop.f32.mrb[0].mxu0
    %v2315 = vadd.f32 %v2272, %v2314
    %v2316 = vpop.f32.mrb[0].mxu0
    %v2317 = vadd.f32 %v2274, %v2316
    %v2318 = vpop.f32.mrb[0].mxu0
    %v2319 = vadd.f32 %v2276, %v2318
    %v2320 = vpop.f32.mrb[0].mxu0
    %v2321 = vadd.f32 %v2278, %v2320
    %2322 = vdwg.mxu0
    %2323 = vmatprep.subr.bf16.mxu0 %v1688
    %2324 = vmatpush1.bf16.msra.mxu0 %v1687
    %2325 = vmatprep.subr.bf16.mxu0 %v1690
    %2326 = vmatpush1.bf16.msra.mxu0 %v1689
    %2327 = vmatprep.subr.bf16.mxu0 %v1692
    %2328 = vmatpush1.bf16.msra.mxu0 %v1691
    %2329 = vmatprep.subr.bf16.mxu0 %v1694
    %2330 = vmatpush1.bf16.msra.mxu0 %v1693
    %2331 = vmatprep.subr.bf16.mxu0 %v1696
    %2332 = vmatpush1.bf16.msra.mxu0 %v1695
    %2333 = vmatprep.subr.bf16.mxu0 %v1698
    %2334 = vmatpush1.bf16.msra.mxu0 %v1697
    %2335 = vmatprep.subr.bf16.mxu0 %v1700
    %2336 = vmatpush1.bf16.msra.mxu0 %v1699
    %2337 = vmatprep.subr.bf16.mxu0 %v1702
    %2338 = vmatpush1.bf16.msra.mxu0 %v1701
    %2339 = vmatprep.subr.bf16.mxu0 %v1704
    %2340 = vmatpush1.bf16.msra.mxu0 %v1703
    %2341 = vmatprep.subr.bf16.mxu0 %v1706
    %2342 = vmatpush1.bf16.msra.mxu0 %v1705
    %2343 = vmatprep.subr.bf16.mxu0 %v1708
    %2344 = vmatpush1.bf16.msra.mxu0 %v1707
    %2345 = vmatprep.subr.bf16.mxu0 %v1710
    %2346 = vmatpush1.bf16.msra.mxu0 %v1709
    %2347 = vmatprep.subr.bf16.mxu0 %v1712
    %2348 = vmatpush1.bf16.msra.mxu0 %v1711
    %2349 = vmatprep.subr.bf16.mxu0 %v1714
    %2350 = vmatpush1.bf16.msra.mxu0 %v1713
    %2351 = vmatprep.subr.bf16.mxu0 %v1716
    %2352 = vmatpush1.bf16.msra.mxu0 %v1715
    %2353 = vmatprep.subr.bf16.mxu0 %v1718
    %2354 = vmatpush1.bf16.msra.mxu0 %v1717
    %2355 = vmatprep.mubr.bf16.mxu0 %v231
    %2356 = vmatmul.mubr.bf16.gmra.mrb[0].mxu0 %v230
    %v2357 = vpop.f32.mrb[0].mxu0
    %v2358 = vadd.f32 %v2315, %v2357
    %v2359 = vpop.f32.mrb[0].mxu0
    %v2360 = vadd.f32 %v2317, %v2359
    %v2361 = vpop.f32.mrb[0].mxu0
    %v2362 = vadd.f32 %v2319, %v2361
    %v2363 = vpop.f32.mrb[0].mxu0
    %v2364 = vadd.f32 %v2321, %v2363
    %2365 = vdwg.mxu0
    %2366 = vmatprep.subr.bf16.mxu0 %v1720
    %2367 = vmatpush1.bf16.msra.mxu0 %v1719
    %2368 = vmatprep.subr.bf16.mxu0 %v1722
    %2369 = vmatpush1.bf16.msra.mxu0 %v1721
    %2370 = vmatprep.subr.bf16.mxu0 %v1724
    %2371 = vmatpush1.bf16.msra.mxu0 %v1723
    %2372 = vmatprep.subr.bf16.mxu0 %v1726
    %2373 = vmatpush1.bf16.msra.mxu0 %v1725
    %2374 = vmatprep.subr.bf16.mxu0 %v1728
    %2375 = vmatpush1.bf16.msra.mxu0 %v1727
    %2376 = vmatprep.subr.bf16.mxu0 %v1730
    %2377 = vmatpush1.bf16.msra.mxu0 %v1729
    %2378 = vmatprep.subr.bf16.mxu0 %v1732
    %2379 = vmatpush1.bf16.msra.mxu0 %v1731
    %2380 = vmatprep.subr.bf16.mxu0 %v1734
    %2381 = vmatpush1.bf16.msra.mxu0 %v1733
    %2382 = vmatprep.subr.bf16.mxu0 %v1736
    %2383 = vmatpush1.bf16.msra.mxu0 %v1735
    %2384 = vmatprep.subr.bf16.mxu0 %v1738
    %2385 = vmatpush1.bf16.msra.mxu0 %v1737
    %2386 = vmatprep.subr.bf16.mxu0 %v1740
    %2387 = vmatpush1.bf16.msra.mxu0 %v1739
    %2388 = vmatprep.subr.bf16.mxu0 %v1742
    %2389 = vmatpush1.bf16.msra.mxu0 %v1741
    %2390 = vmatprep.subr.bf16.mxu0 %v1744
    %2391 = vmatpush1.bf16.msra.mxu0 %v1743
    %2392 = vmatprep.subr.bf16.mxu0 %v1746
    %2393 = vmatpush1.bf16.msra.mxu0 %v1745
    %2394 = vmatprep.subr.bf16.mxu0 %v1748
    %2395 = vmatpush1.bf16.msra.mxu0 %v1747
    %2396 = vmatprep.subr.bf16.mxu0 %v1750
    %2397 = vmatpush1.bf16.msra.mxu0 %v1749
    %2398 = vmatprep.mubr.bf16.mxu0 %v233
    %2399 = vmatmul.mubr.bf16.gmra.mrb[0].mxu0 %v232
    %v2400 = vpop.f32.mrb[0].mxu0
    %v2401 = vadd.f32 %v2358, %v2400
    %v2402 = vpop.f32.mrb[0].mxu0
    %v2403 = vadd.f32 %v2360, %v2402
    %v2404 = vpop.f32.mrb[0].mxu0
    %v2405 = vadd.f32 %v2362, %v2404
    %v2406 = vpop.f32.mrb[0].mxu0
    %v2407 = vadd.f32 %v2364, %v2406
    %2408 = vdwg.mxu0
    %2409 = vmatprep.subr.bf16.mxu0 %v1752
    %2410 = vmatpush1.bf16.msra.mxu0 %v1751
    %2411 = vmatprep.subr.bf16.mxu0 %v1754
    %2412 = vmatpush1.bf16.msra.mxu0 %v1753
    %2413 = vmatprep.subr.bf16.mxu0 %v1756
    %2414 = vmatpush1.bf16.msra.mxu0 %v1755
    %2415 = vmatprep.subr.bf16.mxu0 %v1758
    %2416 = vmatpush1.bf16.msra.mxu0 %v1757
    %2417 = vmatprep.subr.bf16.mxu0 %v1760
    %2418 = vmatpush1.bf16.msra.mxu0 %v1759
    %2419 = vmatprep.subr.bf16.mxu0 %v1762
    %2420 = vmatpush1.bf16.msra.mxu0 %v1761
    %2421 = vmatprep.subr.bf16.mxu0 %v1764
    %2422 = vmatpush1.bf16.msra.mxu0 %v1763
    %2423 = vmatprep.subr.bf16.mxu0 %v1766
    %2424 = vmatpush1.bf16.msra.mxu0 %v1765
    %2425 = vmatprep.subr.bf16.mxu0 %v1768
    %2426 = vmatpush1.bf16.msra.mxu0 %v1767
    %2427 = vmatprep.subr.bf16.mxu0 %v1770
    %2428 = vmatpush1.bf16.msra.mxu0 %v1769
    %2429 = vmatprep.subr.bf16.mxu0 %v1772
    %2430 = vmatpush1.bf16.msra.mxu0 %v1771
    %2431 = vmatprep.subr.bf16.mxu0 %v1774
    %2432 = vmatpush1.bf16.msra.mxu0 %v1773
    %2433 = vmatprep.subr.bf16.mxu0 %v1776
    %2434 = vmatpush1.bf16.msra.mxu0 %v1775
    %2435 = vmatprep.subr.bf16.mxu0 %v1778
    %2436 = vmatpush1.bf16.msra.mxu0 %v1777
    %2437 = vmatprep.subr.bf16.mxu0 %v1780
    %2438 = vmatpush1.bf16.msra.mxu0 %v1779
    %2439 = vmatprep.subr.bf16.mxu0 %v1782
    %2440 = vmatpush1.bf16.msra.mxu0 %v1781
    %2441 = vmatprep.mubr.bf16.mxu0 %v235
    %2442 = vmatmul.mubr.bf16.gmra.mrb[0].mxu0 %v234
    %v2443 = vpop.f32.mrb[0].mxu0
    %v2444 = vadd.f32 %v2401, %v2443
    %v2445 = vpop.f32.mrb[0].mxu0
    %v2446 = vadd.f32 %v2403, %v2445
    %v2447 = vpop.f32.mrb[0].mxu0
    %v2448 = vadd.f32 %v2405, %v2447
    %v2449 = vpop.f32.mrb[0].mxu0
    %v2450 = vadd.f32 %v2407, %v2449
    %2451 = vdwg.mxu0
    %2452 = vmatprep.subr.bf16.mxu0 %v1784
    %2453 = vmatpush1.bf16.msra.mxu0 %v1783
    %2454 = vmatprep.subr.bf16.mxu0 %v1786
    %2455 = vmatpush1.bf16.msra.mxu0 %v1785
    %2456 = vmatprep.subr.bf16.mxu0 %v1788
    %2457 = vmatpush1.bf16.msra.mxu0 %v1787
    %2458 = vmatprep.subr.bf16.mxu0 %v1790
    %2459 = vmatpush1.bf16.msra.mxu0 %v1789
    %2460 = vmatprep.subr.bf16.mxu0 %v1792
    %2461 = vmatpush1.bf16.msra.mxu0 %v1791
    %2462 = vmatprep.subr.bf16.mxu0 %v1794
    %2463 = vmatpush1.bf16.msra.mxu0 %v1793
    %2464 = vmatprep.subr.bf16.mxu0 %v1796
    %2465 = vmatpush1.bf16.msra.mxu0 %v1795
    %2466 = vmatprep.subr.bf16.mxu0 %v1798
    %2467 = vmatpush1.bf16.msra.mxu0 %v1797
    %2468 = vmatprep.subr.bf16.mxu0 %v1800
    %2469 = vmatpush1.bf16.msra.mxu0 %v1799
    %2470 = vmatprep.subr.bf16.mxu0 %v1802
    %2471 = vmatpush1.bf16.msra.mxu0 %v1801
    %2472 = vmatprep.subr.bf16.mxu0 %v1804
    %2473 = vmatpush1.bf16.msra.mxu0 %v1803
    %2474 = vmatprep.subr.bf16.mxu0 %v1806
    %2475 = vmatpush1.bf16.msra.mxu0 %v1805
    %2476 = vmatprep.subr.bf16.mxu0 %v1808
    %2477 = vmatpush1.bf16.msra.mxu0 %v1807
    %2478 = vmatprep.subr.bf16.mxu0 %v1810
    %2479 = vmatpush1.bf16.msra.mxu0 %v1809
    %2480 = vmatprep.subr.bf16.mxu0 %v1812
    %2481 = vmatpush1.bf16.msra.mxu0 %v1811
    %2482 = vmatprep.subr.bf16.mxu0 %v1814
    %2483 = vmatpush1.bf16.msra.mxu0 %v1813
    %2484 = vmatprep.mubr.bf16.mxu0 %v237
    %2485 = vmatmul.mubr.bf16.gmra.mrb[0].mxu0 %v236
    %v2486 = vpop.f32.mrb[0].mxu0
    %v2487 = vadd.f32 %v2444, %v2486
    %v2488 = vpop.f32.mrb[0].mxu0
    %v2489 = vadd.f32 %v2446, %v2488
    %v2490 = vpop.f32.mrb[0].mxu0
    %v2491 = vadd.f32 %v2448, %v2490
    %v2492 = vpop.f32.mrb[0].mxu0
    %v2493 = vadd.f32 %v2450, %v2492
    %2494 = vdwg.mxu0
    %2495 = vmatprep.subr.bf16.mxu0 %v1816
    %2496 = vmatpush1.bf16.msra.mxu0 %v1815
    %2497 = vmatprep.subr.bf16.mxu0 %v1818
    %2498 = vmatpush1.bf16.msra.mxu0 %v1817
    %2499 = vmatprep.subr.bf16.mxu0 %v1820
    %2500 = vmatpush1.bf16.msra.mxu0 %v1819
    %2501 = vmatprep.subr.bf16.mxu0 %v1822
    %2502 = vmatpush1.bf16.msra.mxu0 %v1821
    %2503 = vmatprep.subr.bf16.mxu0 %v1824
    %2504 = vmatpush1.bf16.msra.mxu0 %v1823
    %2505 = vmatprep.subr.bf16.mxu0 %v1826
    %2506 = vmatpush1.bf16.msra.mxu0 %v1825
    %2507 = vmatprep.subr.bf16.mxu0 %v1828
    %2508 = vmatpush1.bf16.msra.mxu0 %v1827
    %2509 = vmatprep.subr.bf16.mxu0 %v1830
    %2510 = vmatpush1.bf16.msra.mxu0 %v1829
    %2511 = vmatprep.subr.bf16.mxu0 %v1832
    %2512 = vmatpush1.bf16.msra.mxu0 %v1831
    %2513 = vmatprep.subr.bf16.mxu0 %v1834
    %2514 = vmatpush1.bf16.msra.mxu0 %v1833
    %2515 = vmatprep.subr.bf16.mxu0 %v1836
    %2516 = vmatpush1.bf16.msra.mxu0 %v1835
    %2517 = vmatprep.subr.bf16.mxu0 %v1838
    %2518 = vmatpush1.bf16.msra.mxu0 %v1837
    %2519 = vmatprep.subr.bf16.mxu0 %v1840
    %2520 = vmatpush1.bf16.msra.mxu0 %v1839
    %2521 = vmatprep.subr.bf16.mxu0 %v1842
    %2522 = vmatpush1.bf16.msra.mxu0 %v1841
    %2523 = vmatprep.subr.bf16.mxu0 %v1844
    %2524 = vmatpush1.bf16.msra.mxu0 %v1843
    %2525 = vmatprep.subr.bf16.mxu0 %v1846
    %2526 = vmatpush1.bf16.msra.mxu0 %v1845
    %2527 = vmatprep.mubr.bf16.mxu0 %v239
    %2528 = vmatmul.mubr.bf16.gmra.mrb[0].mxu0 %v238
    %v2529 = vpop.f32.mrb[0].mxu0
    %v2530 = vadd.f32 %v2487, %v2529
    %v2531 = vpop.f32.mrb[0].mxu0
    %v2532 = vadd.f32 %v2489, %v2531
    %v2533 = vpop.f32.mrb[0].mxu0
    %v2534 = vadd.f32 %v2491, %v2533
    %v2535 = vpop.f32.mrb[0].mxu0
    %v2536 = vadd.f32 %v2493, %v2535
    %2537 = vdwg.mxu0
    %2538 = vmatprep.subr.bf16.mxu0 %v1848
    %2539 = vmatpush1.bf16.msra.mxu0 %v1847
    %2540 = vmatprep.subr.bf16.mxu0 %v1850
    %2541 = vmatpush1.bf16.msra.mxu0 %v1849
    %2542 = vmatprep.subr.bf16.mxu0 %v1852
    %2543 = vmatpush1.bf16.msra.mxu0 %v1851
    %2544 = vmatprep.subr.bf16.mxu0 0
    %2545 = vmatpush1.bf16.msra.mxu0 0
    %2546 = vmatprep.subr.bf16.mxu0 0
    %2547 = vmatpush1.bf16.msra.mxu0 0
    %2548 = vmatprep.subr.bf16.mxu0 0
    %2549 = vmatpush1.bf16.msra.mxu0 0
    %2550 = vmatprep.subr.bf16.mxu0 0
    %2551 = vmatpush1.bf16.msra.mxu0 0
    %2552 = vmatprep.subr.bf16.mxu0 0
    %2553 = vmatpush1.bf16.msra.mxu0 0
    %2554 = vmatprep.subr.bf16.mxu0 0
    %2555 = vmatpush1.bf16.msra.mxu0 0
    %2556 = vmatprep.subr.bf16.mxu0 0
    %2557 = vmatpush1.bf16.msra.mxu0 0
    %2558 = vmatprep.subr.bf16.mxu0 0
    %2559 = vmatpush1.bf16.msra.mxu0 0
    %2560 = vmatprep.subr.bf16.mxu0 0
    %2561 = vmatpush1.bf16.msra.mxu0 0
    %2562 = vmatprep.subr.bf16.mxu0 0
    %2563 = vmatpush1.bf16.msra.mxu0 0
    %2564 = vmatprep.subr.bf16.mxu0 0
    %2565 = vmatpush1.bf16.msra.mxu0 0
    %2566 = vmatprep.subr.bf16.mxu0 0
    %2567 = vmatpush1.bf16.msra.mxu0 0
    %2568 = vmatprep.subr.bf16.mxu0 0
    %2569 = vmatpush1.bf16.msra.mxu0 0
    %2570 = vmatprep.mubr.bf16.mxu0 0
    %2571 = vmatmul.mubr.bf16.gmra.mrb[0].mxu0 %v2149
    %v2572 = vpop.f32.mrb[0].mxu0
    %v2573 = vadd.f32 %v2530, %v2572
    %v2574 = vpop.f32.mrb[0].mxu0
    %v2575 = vadd.f32 %v2532, %v2574
    %v2576 = vpop.f32.mrb[0].mxu0
    %v2577 = vadd.f32 %v2534, %v2576
    %v2578 = vpop.f32.mrb[0].mxu0
    %v2579 = vadd.f32 %v2536, %v2578
    %2580 = vdwg.mxu0
    %v2581 = vld [vmem:[#allocation6] sm:$0x3]
    %v2583 = vlaneseq
    %v2584 = vshrl.u32 %v2583, 7
    %v2585 = vsub.s32 0, %v2584
    %v2586 = vrot.slane %v2581, %v2585
    %v2587 = vlaneseq
    %v2588 = vshrl.u32 %v2587, 7
    %v2589 = vsub.s32 1, %v2588
    %v2590 = vrot.slane %v2581, %v2589
    %v2593 = vadd.f32 %v2573, %v2586
    %v2594 = vadd.f32 %v2575, %v2590
    %v2595 = vadd.f32 %v2577, %v2586
    %v2596 = vadd.f32 %v2579, %v2590
    %v2597 = vmul.f32 %v2593, 0.2
    %v2598 = vmul.f32 %v2594, 0.2
    %v2599 = vmul.f32 %v2595, 0.2
    %v2600 = vmul.f32 %v2596, 0.2
    %v2601 = vmax.f32 %v2593, %v2597
    %v2602 = vmax.f32 %v2594, %v2598
    %v2603 = vmax.f32 %v2595, %v2599
    %v2604 = vmax.f32 %v2596, %v2600
    %v2605 = vpack.c.bf16 %v2603, %v2601
    %v2606 = vpack.c.bf16 %v2604, %v2602
    %v2607 = vld [vmem:[#allocation7] sm:$0xf]
    %v2608 = vld [vmem:[#allocation7 + $0x4] sm:$0xf]
    %v2609 = vld [vmem:[#allocation7 + $0x8] sm:$0xf]
    %v2610 = vld [vmem:[#allocation7 + $0xc] sm:$0xf]
    %v2611 = vld [vmem:[#allocation7 + $0x10] sm:$0xf]
    %v2612 = vld [vmem:[#allocation7 + $0x14] sm:$0xf]
    %v2613 = vld [vmem:[#allocation7 + $0x18] sm:$0xf]
    %v2614 = vld [vmem:[#allocation7 + $0x1c] sm:$0xf]
    %v2615 = vld [vmem:[#allocation7 + $0x20] sm:$0xf]
    %v2616 = vld [vmem:[#allocation7 + $0x24] sm:$0xf]
    %v2617 = vld [vmem:[#allocation7 + $0x28] sm:$0xf]
    %v2618 = vld [vmem:[#allocation7 + $0x2c] sm:$0xf]
    %v2619 = vld [vmem:[#allocation7 + $0x30] sm:$0xf]
    %v2620 = vld [vmem:[#allocation7 + $0x34] sm:$0xf]
    %v2621 = vld [vmem:[#allocation7 + $0x38] sm:$0xf]
    %v2622 = vld [vmem:[#allocation7 + $0x3c] sm:$0xf]
    %v2623 = vld [vmem:[#allocation7 + $0x40] sm:$0xf]
    %v2624 = vld [vmem:[#allocation7 + $0x44] sm:$0xf]
    %v2625 = vld [vmem:[#allocation7 + $0x48] sm:$0xf]
    %v2626 = vld [vmem:[#allocation7 + $0x4c] sm:$0xf]
    %v2627 = vld [vmem:[#allocation7 + $0x50] sm:$0xf]
    %v2628 = vld [vmem:[#allocation7 + $0x54] sm:$0xf]
    %v2629 = vld [vmem:[#allocation7 + $0x58] sm:$0xf]
    %v2630 = vld [vmem:[#allocation7 + $0x5c] sm:$0xf]
    %v2631 = vld [vmem:[#allocation7 + $0x60] sm:$0xf]
    %v2632 = vld [vmem:[#allocation7 + $0x64] sm:$0xf]
    %v2633 = vld [vmem:[#allocation7 + $0x68] sm:$0xf]
    %v2634 = vld [vmem:[#allocation7 + $0x6c] sm:$0xf]
    %v2635 = vld [vmem:[#allocation7 + $0x70] sm:$0xf]
    %v2636 = vld [vmem:[#allocation7 + $0x74] sm:$0xf]
    %v2637 = vld [vmem:[#allocation7 + $0x78] sm:$0xf]
    %v2638 = vld [vmem:[#allocation7 + $0x7c] sm:$0xf]
    %v2639 = vld [vmem:[#allocation9] sm:$0x1]
    %v2641 = vlaneseq
    %v2642 = vshrl.u32 %v2641, 7
    %v2643 = vsub.s32 0, %v2642
    %v2644 = vrot.slane %v2639, %v2643
    %v2678 = vunpack.c.l.b16 %v2607
    %v2679 = vunpack.c.l.b16 %v2608
    %v2680 = vunpack.c.l.b16 %v2609
    %v2681 = vunpack.c.l.b16 %v2610
    %v2682 = vunpack.c.l.b16 %v2611
    %v2683 = vunpack.c.l.b16 %v2612
    %v2684 = vunpack.c.l.b16 %v2613
    %v2685 = vunpack.c.l.b16 %v2614
    %v2686 = vunpack.c.l.b16 %v2615
    %v2687 = vunpack.c.l.b16 %v2616
    %v2688 = vunpack.c.l.b16 %v2617
    %v2689 = vunpack.c.l.b16 %v2618
    %v2690 = vunpack.c.l.b16 %v2619
    %v2691 = vunpack.c.l.b16 %v2620
    %v2692 = vunpack.c.l.b16 %v2621
    %v2693 = vunpack.c.l.b16 %v2622
    %v2694 = vunpack.c.l.b16 %v2623
    %v2695 = vunpack.c.l.b16 %v2624
    %v2696 = vunpack.c.l.b16 %v2625
    %v2697 = vunpack.c.l.b16 %v2626
    %v2698 = vunpack.c.l.b16 %v2627
    %v2699 = vunpack.c.l.b16 %v2628
    %v2700 = vunpack.c.l.b16 %v2629
    %v2701 = vunpack.c.l.b16 %v2630
    %v2702 = vunpack.c.l.b16 %v2631
    %v2703 = vunpack.c.l.b16 %v2632
    %v2704 = vunpack.c.l.b16 %v2633
    %v2705 = vunpack.c.l.b16 %v2634
    %v2706 = vunpack.c.l.b16 %v2635
    %v2707 = vunpack.c.l.b16 %v2636
    %v2708 = vunpack.c.l.b16 %v2637
    %v2709 = vunpack.c.l.b16 %v2638
    %v2710 = vpack.c.b16 %v2679, %v2678
    %v2711 = vpack.c.b16 %v2681, %v2680
    %v2712 = vpack.c.b16 %v2683, %v2682
    %v2713 = vpack.c.b16 %v2685, %v2684
    %v2714 = vpack.c.b16 %v2687, %v2686
    %v2715 = vpack.c.b16 %v2689, %v2688
    %v2716 = vpack.c.b16 %v2691, %v2690
    %v2717 = vpack.c.b16 %v2693, %v2692
    %v2718 = vpack.c.b16 %v2695, %v2694
    %v2719 = vpack.c.b16 %v2697, %v2696
    %v2720 = vpack.c.b16 %v2699, %v2698
    %v2721 = vpack.c.b16 %v2701, %v2700
    %v2722 = vpack.c.b16 %v2703, %v2702
    %v2723 = vpack.c.b16 %v2705, %v2704
    %v2724 = vpack.c.b16 %v2707, %v2706
    %v2725 = vpack.c.b16 %v2709, %v2708
    %2742 = vmatprep.subr.bf16.mxu0 0
    %2743 = vmatpush1.bf16.msra.mxu0 %v2710
    %2744 = vmatprep.subr.bf16.mxu0 0
    %2745 = vmatpush1.bf16.msra.mxu0 %v2711
    %2746 = vmatprep.subr.bf16.mxu0 0
    %2747 = vmatpush1.bf16.msra.mxu0 %v2712
    %2748 = vmatprep.subr.bf16.mxu0 0
    %2749 = vmatpush1.bf16.msra.mxu0 %v2713
    %2750 = vmatprep.subr.bf16.mxu0 0
    %2751 = vmatpush1.bf16.msra.mxu0 %v2714
    %2752 = vmatprep.subr.bf16.mxu0 0
    %2753 = vmatpush1.bf16.msra.mxu0 %v2715
    %2754 = vmatprep.subr.bf16.mxu0 0
    %2755 = vmatpush1.bf16.msra.mxu0 %v2716
    %2756 = vmatprep.subr.bf16.mxu0 0
    %2757 = vmatpush1.bf16.msra.mxu0 %v2717
    %2758 = vmatprep.subr.bf16.mxu0 0
    %2759 = vmatpush1.bf16.msra.mxu0 %v2718
    %2760 = vmatprep.subr.bf16.mxu0 0
    %2761 = vmatpush1.bf16.msra.mxu0 %v2719
    %2762 = vmatprep.subr.bf16.mxu0 0
    %2763 = vmatpush1.bf16.msra.mxu0 %v2720
    %2764 = vmatprep.subr.bf16.mxu0 0
    %2765 = vmatpush1.bf16.msra.mxu0 %v2721
    %2766 = vmatprep.subr.bf16.mxu0 0
    %2767 = vmatpush1.bf16.msra.mxu0 %v2722
    %2768 = vmatprep.subr.bf16.mxu0 0
    %2769 = vmatpush1.bf16.msra.mxu0 %v2723
    %2770 = vmatprep.subr.bf16.mxu0 0
    %2771 = vmatpush1.bf16.msra.mxu0 %v2724
    %2772 = vmatprep.subr.bf16.mxu0 0
    %2773 = vmatpush1.bf16.msra.mxu0 %v2725
    %2774 = vmatprep.mubr.bf16.mxu0 %v2606
    %2775 = vmatmul.mubr.bf16.gmra.mrb[0].mxu0 %v2605
    %v2776 = vpop.f32.mrb[0].mxu0
    %v2777 = vadd.f32 %v2644, %v2776
    %v2778 = vpop.f32.mrb[0].mxu0
    %v2779 = vpop.f32.mrb[0].mxu0
    %v2780 = vadd.f32 %v2644, %v2779
    %v2781 = vpop.f32.mrb[0].mxu0
    %2782 = vdwg.mxu0
    %v2783 = vmul.f32 %v2777, 0.2
    %v2784 = vmul.f32 %v2780, 0.2
    %v2785 = vmax.f32 %v2777, %v2783
    %v2786 = vmax.f32 %v2780, %v2784
    %v2787 = vpack.c.bf16 %v2786, %v2785
    %v2788 = vld [vmem:[#allocation10] sm:$0xf]
    %v2789 = vld [vmem:[#allocation10 + $0x4] sm:$0xf]
    %v2790 = vld [vmem:[#allocation10 + $0x8] sm:$0xf]
    %v2791 = vld [vmem:[#allocation10 + $0xc] sm:$0xf]
    %v2792 = vld [vmem:[#allocation10 + $0x10] sm:$0xf]
    %v2793 = vld [vmem:[#allocation10 + $0x14] sm:$0xf]
    %v2794 = vld [vmem:[#allocation10 + $0x18] sm:$0xf]
    %v2795 = vld [vmem:[#allocation10 + $0x1c] sm:$0xf]
    %v2796 = vld [vmem:[#allocation10 + $0x20] sm:$0xf]
    %v2797 = vld [vmem:[#allocation10 + $0x24] sm:$0xf]
    %v2798 = vld [vmem:[#allocation10 + $0x28] sm:$0xf]
    %v2799 = vld [vmem:[#allocation10 + $0x2c] sm:$0xf]
    %v2800 = vld [vmem:[#allocation10 + $0x30] sm:$0xf]
    %v2801 = vld [vmem:[#allocation10 + $0x34] sm:$0xf]
    %v2802 = vld [vmem:[#allocation10 + $0x38] sm:$0xf]
    %v2803 = vld [vmem:[#allocation10 + $0x3c] sm:$0xf]
    %v2804 = vld [vmem:[#allocation12] sm:$0x1]
    %v2806 = vlaneseq
    %v2807 = vshrl.u32 %v2806, 7
    %v2808 = vsub.s32 0, %v2807
    %v2809 = vrot.slane %v2804, %v2808
    %v2827 = vunpack.c.l.b16 %v2788
    %v2828 = vunpack.c.l.b16 %v2789
    %v2829 = vunpack.c.l.b16 %v2790
    %v2830 = vunpack.c.l.b16 %v2791
    %v2831 = vunpack.c.l.b16 %v2792
    %v2832 = vunpack.c.l.b16 %v2793
    %v2833 = vunpack.c.l.b16 %v2794
    %v2834 = vunpack.c.l.b16 %v2795
    %v2835 = vunpack.c.l.b16 %v2796
    %v2836 = vunpack.c.l.b16 %v2797
    %v2837 = vunpack.c.l.b16 %v2798
    %v2838 = vunpack.c.l.b16 %v2799
    %v2839 = vunpack.c.l.b16 %v2800
    %v2840 = vunpack.c.l.b16 %v2801
    %v2841 = vunpack.c.l.b16 %v2802
    %v2842 = vunpack.c.l.b16 %v2803
    %v2843 = vpack.c.b16 %v2828, %v2827
    %v2844 = vpack.c.b16 %v2830, %v2829
    %v2845 = vpack.c.b16 %v2832, %v2831
    %v2846 = vpack.c.b16 %v2834, %v2833
    %v2847 = vpack.c.b16 %v2836, %v2835
    %v2848 = vpack.c.b16 %v2838, %v2837
    %v2849 = vpack.c.b16 %v2840, %v2839
    %v2850 = vpack.c.b16 %v2842, %v2841
    %2859 = vmatprep.subr.bf16.mxu0 0
    %2860 = vmatpush1.bf16.msra.mxu0 %v2843
    %2861 = vmatprep.subr.bf16.mxu0 0
    %2862 = vmatpush1.bf16.msra.mxu0 %v2844
    %2863 = vmatprep.subr.bf16.mxu0 0
    %2864 = vmatpush1.bf16.msra.mxu0 %v2845
    %2865 = vmatprep.subr.bf16.mxu0 0
    %2866 = vmatpush1.bf16.msra.mxu0 %v2846
    %2867 = vmatprep.subr.bf16.mxu0 0
    %2868 = vmatpush1.bf16.msra.mxu0 %v2847
    %2869 = vmatprep.subr.bf16.mxu0 0
    %2870 = vmatpush1.bf16.msra.mxu0 %v2848
    %2871 = vmatprep.subr.bf16.mxu0 0
    %2872 = vmatpush1.bf16.msra.mxu0 %v2849
    %2873 = vmatprep.subr.bf16.mxu0 0
    %2874 = vmatpush1.bf16.msra.mxu0 %v2850
    %2875 = vmatprep.subr.bf16.mxu0 0
    %2876 = vmatpush1.bf16.msra.mxu0 0
    %2877 = vmatprep.subr.bf16.mxu0 0
    %2878 = vmatpush1.bf16.msra.mxu0 0
    %2879 = vmatprep.subr.bf16.mxu0 0
    %2880 = vmatpush1.bf16.msra.mxu0 0
    %2881 = vmatprep.subr.bf16.mxu0 0
    %2882 = vmatpush1.bf16.msra.mxu0 0
    %2883 = vmatprep.subr.bf16.mxu0 0
    %2884 = vmatpush1.bf16.msra.mxu0 0
    %2885 = vmatprep.subr.bf16.mxu0 0
    %2886 = vmatpush1.bf16.msra.mxu0 0
    %2887 = vmatprep.subr.bf16.mxu0 0
    %2888 = vmatpush1.bf16.msra.mxu0 0
    %2889 = vmatprep.subr.bf16.mxu0 0
    %2890 = vmatpush1.bf16.msra.mxu0 0
    %2891 = vmatprep.mubr.bf16.mxu0 0
    %2892 = vmatmul.mubr.bf16.gmra.mrb[0].mxu0 %v2787
    %v2893 = vpop.f32.mrb[0].mxu0
    %v2894 = vadd.f32 %v2809, %v2893
    %v2895 = vpop.f32.mrb[0].mxu0
    %v2896 = vpop.f32.mrb[0].mxu0
    %v2897 = vadd.f32 %v2809, %v2896
    %v2898 = vpop.f32.mrb[0].mxu0
    %2899 = vdwg.mxu0
    %v2900 = vmul.f32 %v2894, 0.2
    %v2901 = vmul.f32 %v2897, 0.2
    %v2902 = vmax.f32 %v2894, %v2900
    %v2903 = vmax.f32 %v2897, %v2901
    %v2904 = vpack.c.bf16 %v2903, %v2902
    %v2905 = vld [vmem:[#allocation13] sm:$0xf]
    %v2906 = vld [vmem:[#allocation13 + $0x4] sm:$0xf]
    %v2907 = vld [vmem:[#allocation13 + $0x8] sm:$0xf]
    %v2908 = vld [vmem:[#allocation13 + $0xc] sm:$0xf]
    %v2909 = vld [vmem:[#allocation13 + $0x10] sm:$0xf]
    %v2910 = vld [vmem:[#allocation13 + $0x14] sm:$0xf]
    %v2911 = vld [vmem:[#allocation13 + $0x18] sm:$0xf]
    %v2912 = vld [vmem:[#allocation13 + $0x1c] sm:$0xf]
    %v2913 = vld [vmem:[#allocation13 + $0x20] sm:$0xf]
    %v2914 = vld [vmem:[#allocation13 + $0x24] sm:$0xf]
    %v2915 = vld [vmem:[#allocation13 + $0x28] sm:$0xf]
    %v2916 = vld [vmem:[#allocation13 + $0x2c] sm:$0xf]
    %v2917 = vld [vmem:[#allocation13 + $0x30] sm:$0xf]
    %v2918 = vld [vmem:[#allocation13 + $0x34] sm:$0xf]
    %v2919 = vld [vmem:[#allocation13 + $0x38] sm:$0xf]
    %v2920 = vld [vmem:[#allocation13 + $0x3c] sm:$0xf]
    %v2921 = vld [vmem:[#allocation15] sm:$0x1]
    %v2923 = vlaneseq
    %v2924 = vshrl.u32 %v2923, 7
    %v2925 = vsub.s32 0, %v2924
    %v2926 = vrot.slane %v2921, %v2925
    %v2944 = vunpack.c.l.b16 %v2905
    %v2945 = vunpack.c.l.b16 %v2906
    %v2946 = vunpack.c.l.b16 %v2907
    %v2947 = vunpack.c.l.b16 %v2908
    %v2948 = vunpack.c.l.b16 %v2909
    %v2949 = vunpack.c.l.b16 %v2910
    %v2950 = vunpack.c.l.b16 %v2911
    %v2951 = vunpack.c.l.b16 %v2912
    %v2952 = vunpack.c.l.b16 %v2913
    %v2953 = vunpack.c.l.b16 %v2914
    %v2954 = vunpack.c.l.b16 %v2915
    %v2955 = vunpack.c.l.b16 %v2916
    %v2956 = vunpack.c.l.b16 %v2917
    %v2957 = vunpack.c.l.b16 %v2918
    %v2958 = vunpack.c.l.b16 %v2919
    %v2959 = vunpack.c.l.b16 %v2920
    %v2960 = vpack.c.b16 %v2945, %v2944
    %v2961 = vpack.c.b16 %v2947, %v2946
    %v2962 = vpack.c.b16 %v2949, %v2948
    %v2963 = vpack.c.b16 %v2951, %v2950
    %v2964 = vpack.c.b16 %v2953, %v2952
    %v2965 = vpack.c.b16 %v2955, %v2954
    %v2966 = vpack.c.b16 %v2957, %v2956
    %v2967 = vpack.c.b16 %v2959, %v2958
    %2976 = vmatprep.subr.bf16.mxu0 0
    %2977 = vmatpush1.bf16.msra.mxu0 %v2960
    %2978 = vmatprep.subr.bf16.mxu0 0
    %2979 = vmatpush1.bf16.msra.mxu0 %v2961
    %2980 = vmatprep.subr.bf16.mxu0 0
    %2981 = vmatpush1.bf16.msra.mxu0 %v2962
    %2982 = vmatprep.subr.bf16.mxu0 0
    %2983 = vmatpush1.bf16.msra.mxu0 %v2963
    %2984 = vmatprep.subr.bf16.mxu0 0
    %2985 = vmatpush1.bf16.msra.mxu0 %v2964
    %2986 = vmatprep.subr.bf16.mxu0 0
    %2987 = vmatpush1.bf16.msra.mxu0 %v2965
    %2988 = vmatprep.subr.bf16.mxu0 0
    %2989 = vmatpush1.bf16.msra.mxu0 %v2966
    %2990 = vmatprep.subr.bf16.mxu0 0
    %2991 = vmatpush1.bf16.msra.mxu0 %v2967
    %2992 = vmatprep.subr.bf16.mxu0 0
    %2993 = vmatpush1.bf16.msra.mxu0 0
    %2994 = vmatprep.subr.bf16.mxu0 0
    %2995 = vmatpush1.bf16.msra.mxu0 0
    %2996 = vmatprep.subr.bf16.mxu0 0
    %2997 = vmatpush1.bf16.msra.mxu0 0
    %2998 = vmatprep.subr.bf16.mxu0 0
    %2999 = vmatpush1.bf16.msra.mxu0 0
    %3000 = vmatprep.subr.bf16.mxu0 0
    %3001 = vmatpush1.bf16.msra.mxu0 0
    %3002 = vmatprep.subr.bf16.mxu0 0
    %3003 = vmatpush1.bf16.msra.mxu0 0
    %3004 = vmatprep.subr.bf16.mxu0 0
    %3005 = vmatpush1.bf16.msra.mxu0 0
    %3006 = vmatprep.subr.bf16.mxu0 0
    %3007 = vmatpush1.bf16.msra.mxu0 0
    %3008 = vmatprep.mubr.bf16.mxu0 0
    %3009 = vmatmul.mubr.bf16.gmra.mrb[0].mxu0 %v2904
    %v3010 = vpop.f32.mrb[0].mxu0
    %v3011 = vadd.f32 %v2926, %v3010
    %v3012 = vpop.f32.mrb[0].mxu0
    %v3013 = vpop.f32.mrb[0].mxu0
    %v3014 = vadd.f32 %v2926, %v3013
    %v3015 = vpop.f32.mrb[0].mxu0
    %3016 = vdwg.mxu0
    %v3017 = vmul.f32 %v3011, 0.2
    %v3018 = vmul.f32 %v3014, 0.2
    %v3019 = vmax.f32 %v3011, %v3017
    %v3020 = vmax.f32 %v3014, %v3018
    %v3021 = vpack.c.bf16 %v3020, %v3019
    %v3022 = vld [vmem:[#allocation16] sm:$0xf]
    %v3023 = vld [vmem:[#allocation16 + $0x4] sm:$0xf]
    %v3024 = vld [vmem:[#allocation16 + $0x8] sm:$0xf]
    %v3025 = vld [vmem:[#allocation16 + $0xc] sm:$0xf]
    %v3026 = vld [vmem:[#allocation16 + $0x10] sm:$0xf]
    %v3027 = vld [vmem:[#allocation16 + $0x14] sm:$0xf]
    %v3028 = vld [vmem:[#allocation16 + $0x18] sm:$0xf]
    %v3029 = vld [vmem:[#allocation16 + $0x1c] sm:$0xf]
    %v3030 = vld [vmem:[#allocation16 + $0x20] sm:$0xf]
    %v3031 = vld [vmem:[#allocation16 + $0x24] sm:$0xf]
    %v3032 = vld [vmem:[#allocation16 + $0x28] sm:$0xf]
    %v3033 = vld [vmem:[#allocation16 + $0x2c] sm:$0xf]
    %v3034 = vld [vmem:[#allocation16 + $0x30] sm:$0xf]
    %v3035 = vld [vmem:[#allocation16 + $0x34] sm:$0xf]
    %v3036 = vld [vmem:[#allocation16 + $0x38] sm:$0xf]
    %v3037 = vld [vmem:[#allocation16 + $0x3c] sm:$0xf]
    %v3038 = vld [vmem:[#allocation18] sm:$0x1]
    %v3040 = vlaneseq
    %v3041 = vshrl.u32 %v3040, 7
    %v3042 = vsub.s32 0, %v3041
    %v3043 = vrot.slane %v3038, %v3042
    %v3061 = vunpack.c.l.b16 %v3022
    %v3062 = vunpack.c.l.b16 %v3023
    %v3063 = vunpack.c.l.b16 %v3024
    %v3064 = vunpack.c.l.b16 %v3025
    %v3065 = vunpack.c.l.b16 %v3026
    %v3066 = vunpack.c.l.b16 %v3027
    %v3067 = vunpack.c.l.b16 %v3028
    %v3068 = vunpack.c.l.b16 %v3029
    %v3069 = vunpack.c.l.b16 %v3030
    %v3070 = vunpack.c.l.b16 %v3031
    %v3071 = vunpack.c.l.b16 %v3032
    %v3072 = vunpack.c.l.b16 %v3033
    %v3073 = vunpack.c.l.b16 %v3034
    %v3074 = vunpack.c.l.b16 %v3035
    %v3075 = vunpack.c.l.b16 %v3036
    %v3076 = vunpack.c.l.b16 %v3037
    %v3077 = vpack.c.b16 %v3062, %v3061
    %v3078 = vpack.c.b16 %v3064, %v3063
    %v3079 = vpack.c.b16 %v3066, %v3065
    %v3080 = vpack.c.b16 %v3068, %v3067
    %v3081 = vpack.c.b16 %v3070, %v3069
    %v3082 = vpack.c.b16 %v3072, %v3071
    %v3083 = vpack.c.b16 %v3074, %v3073
    %v3084 = vpack.c.b16 %v3076, %v3075
    %3093 = vmatprep.subr.bf16.mxu0 0
    %3094 = vmatpush1.bf16.msra.mxu0 %v3077
    %3095 = vmatprep.subr.bf16.mxu0 0
    %3096 = vmatpush1.bf16.msra.mxu0 %v3078
    %3097 = vmatprep.subr.bf16.mxu0 0
    %3098 = vmatpush1.bf16.msra.mxu0 %v3079
    %3099 = vmatprep.subr.bf16.mxu0 0
    %3100 = vmatpush1.bf16.msra.mxu0 %v3080
    %3101 = vmatprep.subr.bf16.mxu0 0
    %3102 = vmatpush1.bf16.msra.mxu0 %v3081
    %3103 = vmatprep.subr.bf16.mxu0 0
    %3104 = vmatpush1.bf16.msra.mxu0 %v3082
    %3105 = vmatprep.subr.bf16.mxu0 0
    %3106 = vmatpush1.bf16.msra.mxu0 %v3083
    %3107 = vmatprep.subr.bf16.mxu0 0
    %3108 = vmatpush1.bf16.msra.mxu0 %v3084
    %3109 = vmatprep.subr.bf16.mxu0 0
    %3110 = vmatpush1.bf16.msra.mxu0 0
    %3111 = vmatprep.subr.bf16.mxu0 0
    %3112 = vmatpush1.bf16.msra.mxu0 0
    %3113 = vmatprep.subr.bf16.mxu0 0
    %3114 = vmatpush1.bf16.msra.mxu0 0
    %3115 = vmatprep.subr.bf16.mxu0 0
    %3116 = vmatpush1.bf16.msra.mxu0 0
    %3117 = vmatprep.subr.bf16.mxu0 0
    %3118 = vmatpush1.bf16.msra.mxu0 0
    %3119 = vmatprep.subr.bf16.mxu0 0
    %3120 = vmatpush1.bf16.msra.mxu0 0
    %3121 = vmatprep.subr.bf16.mxu0 0
    %3122 = vmatpush1.bf16.msra.mxu0 0
    %3123 = vmatprep.subr.bf16.mxu0 0
    %3124 = vmatpush1.bf16.msra.mxu0 0
    %3125 = vmatprep.mubr.bf16.mxu0 0
    %3126 = vmatmul.mubr.bf16.gmra.mrb[0].mxu0 %v3021
    %v3127 = vpop.f32.mrb[0].mxu0
    %v3128 = vadd.f32 %v3043, %v3127
    %v3129 = vpop.f32.mrb[0].mxu0
    %v3130 = vpop.f32.mrb[0].mxu0
    %v3131 = vadd.f32 %v3043, %v3130
    %v3132 = vpop.f32.mrb[0].mxu0
    %3133 = vdwg.mxu0
    %v3134 = vlaneseq
    %v3135 = vand.u32 %v3134, 127
    %vm3136 = vcmp.lt.s32.totalorder %v3135, 10
    %v3137 = vsel %vm3136, %v3128, -1e+30
    %v3138 = vsel %vm3136, %v3131, -1e+30
    %3139 = vmax.xlane.f32.xlu0 %v3137
    %v3140 = vpop.xlane.xlu0 %3139
    %3141 = vmax.xlane.f32.xlu0 %v3138
    %v3142 = vpop.xlane.xlu0 %3141
    %v3143 = vsub.f32 %v3137, %v3140
    %v3144 = vsub.f32 %v3138, %v3142
    %v3145 = vmul.f32 %v3143, 1.442695
    %v3146 = vpow.pop %v3145
    %v3147 = vmul.f32 %v3144, 1.442695
    %v3148 = vpow.pop %v3147
    %v3149 = vsel %vm3136, %v3146, 0.0
    %v3150 = vsel %vm3136, %v3148, 0.0
    %3151 = vadd.xlane.f32.xlu0 %v3149
    %v3152 = vpop.xlane.xlu0 %3151
    %3153 = vadd.xlane.f32.xlu0 %v3150
    %v3154 = vpop.xlane.xlu0 %3153
    %v3155 = vrcp.pop %v3152
    %v3156 = vrcp.pop %v3154
    %v3157 = vmul.f32 %v3149, %v3155
    %v3158 = vmul.f32 %v3150, %v3156
    %v3159 = vmul.f32 %v3128, 0.2
    %v3160 = vmul.f32 %v3131, 0.2
    %v3161 = vmax.f32 %v3128, %v3159
    %v3162 = vmax.f32 %v3131, %v3160
    %v3163 = vsub.f32 0.0, %v3161
    %v3164 = vsub.f32 0.0, %v3162
    %v3165 = vmul.f32 %v3163, 1.442695
    %v3166 = vpow.pop %v3165
    %v3167 = vmul.f32 %v3164, 1.442695
    %v3168 = vpow.pop %v3167
    %v3169 = vadd.f32 %v3166, 1.0
    %v3170 = vadd.f32 %v3168, 1.0
    %v3171 = vrcp.pop %v3169
    %v3172 = vrcp.pop %v3170
    %vm3173 = vcmp.eq.s32.totalorder %v3135, 10
    %v3174 = vsel %vm3173, %v3171, 0.0
    %v3175 = vsel %vm3173, %v3172, 0.0
    %v3176 = vsel %vm3136, %v3157, %v3174
    %v3177 = vsel %vm3136, %v3158, %v3175
    %3178 = vst [vmem:[%s13] sm:$0xff] %v3176
    %3179 = vst [vmem:[%s13 + $0x8] sm:$0xff] %v3177
    // Predicated region
    $region98: #{discriminator_forward.1} parent=1 // pred_check
      _
    $region99: #{discriminator_forward.1} parent=1 // pred_check_branch
      %3181 = sbr.rel (0) target = $region101
    $region100: #{discriminator_forward.1} parent=1 // pred_region
      _
    $region101: #{discriminator_forward.1} parent=1 // pred_fallthru
      _
    // Predicated region
    $region102: #{discriminator_forward.1} parent=1 // pred_check
      _
    $region103: #{discriminator_forward.1} parent=1 // pred_check_branch
      %3183 = sbr.rel (0) target = $region105
    $region104: #{discriminator_forward.1} parent=1 // pred_region
      _
    $region105: #{discriminator_forward.1} parent=1 // pred_fallthru
      _
    %3184 = vsyncpa [#allocation3], 1
    %3185 = vsyncpa [#allocation5], 1
    %3186 = vsyncpa [#allocation8], 1
    %3187 = vsyncpa [#allocation11], 1
    %3188 = vsyncpa [#allocation14], 1
    %3189 = vsyncpa [#allocation17], 1

</llo_original>
